<compile_context>
chip_gen: v7x
topology: tpu7x:2x2x1
jax: 0.10.0
libtpu: 0.0.40
codegen_flags: <defaults>
</compile_context>

<pallas_src>
import functools

import jax
import jax.numpy as jnp
from jax.experimental import pallas as pl
from jax.experimental.pallas import tpu as pltpu

NEG_SLOPE = 0.01   # nn.LeakyReLU default
BN_EPS = 1e-5      # nn.BatchNorm2d default


def _leaky(v):
    return jnp.where(v >= 0, v, NEG_SLOPE * v)


# ---------------------------------------------------------------------------
# Fused kernel: one grid step == one batch element.
# ---------------------------------------------------------------------------
def _tsception_kernel(*refs, n_windows):
    patch_ref = refs[0]                          # (1, C*K_tot, T_pad)
    wt_ref, bt_ref = refs[1], refs[2]            # (W*Rpad, C*K_tot), (W*Rpad, 1)
    mp_refs = refs[3:3 + n_windows]              # (T_pad, T_pool_i) each
    (wsp_ref, bsp_ref, ms_ref,
     wh_ref, bh_ref, wo_ref, bo_ref) = refs[3 + n_windows:10 + n_windows]
    out_ref = refs[10 + n_windows]               # (1, 1, n_out)

    # Temporal inception block: one MXU matmul covering all windows & channels.
    patches = patch_ref[0]                                              # (C*K_tot, T_pad)
    conv = jnp.dot(wt_ref[...], patches,
                   preferred_element_type=jnp.float32) + bt_ref[...]    # (W*Rpad, T_pad)
    conv = _leaky(conv)

    # Temporal AvgPool as matmuls with precomputed pooling matrices.
    rows = conv.shape[0] // n_windows            # Rpad (multiple of 8) rows per window
    tb_parts = [
        jnp.dot(conv[i * rows:(i + 1) * rows, :], mp_refs[i][...],
                preferred_element_type=jnp.float32)
        for i in range(n_windows)
    ]
    tb = jnp.concatenate(tb_parts, axis=1)       # (Rpad, T_total)  == torch.cat(dim=-1)

    # Both Sception blocks in one block-structured matmul (temporal BN pre-folded).
    s = jnp.dot(wsp_ref[...], tb, preferred_element_type=jnp.float32) + bsp_ref[...]
    s = _leaky(s)                                # ((1+H2)*Fs, T_total)

    # Spatial AvgPool.
    pooled = jnp.dot(s, ms_ref[...], preferred_element_type=jnp.float32)  # ((1+H2)*Fs, T_sp)

    # Flatten + dense head (spatial BN folded into wh/bh).
    # TODO(synk): Dropout(p=0.5) is identity at inference; training-mode mask omitted.
    n_rows = pooled.shape[0]
    feat = jnp.concatenate([pooled[r:r + 1, :] for r in range(n_rows)], axis=1)  # (1, F)
    hid = _leaky(jnp.dot(feat, wh_ref[...],
                         preferred_element_type=jnp.float32) + bh_ref[...])      # (1, hidden)
    out_ref[0] = jnp.dot(hid, wo_ref[...],
                         preferred_element_type=jnp.float32) + bo_ref[...]       # (1, n_out)


# ---------------------------------------------------------------------------
# Wrapper-side input prep (the only per-call XLA glue): im2col patches.
# ---------------------------------------------------------------------------
def _im2col(x, kernel_widths, t_pad):
    """(B, C, T) -> (B, C*sum(K), t_pad); row (window, c, k) == x[:, c, k:k+T_out] (0-padded)."""
    B, C, T = x.shape
    j = jnp.arange(t_pad)
    blocks = []
    for K in kernel_widths:
        t_out = T - K + 1
        k = jnp.arange(K)
        idx = jnp.clip(k[:, None] + j[None, :], 0, T - 1)            # (K, t_pad)
        valid = (j[None, :] < t_out).astype(x.dtype)                 # (1, t_pad)
        blk = jnp.take(x, idx, axis=2) * valid                       # (B, C, K, t_pad)
        blocks.append(blk.reshape(B, C * K, t_pad))
    return jnp.concatenate(blocks, axis=1)


def tsception_forward(kparams, x, *, kernel_widths):
    B, C, T = x.shape
    n_win = len(kernel_widths)
    patches = _im2col(x, kernel_widths, T)                           # (B, C*K_tot, T)

    weights = ([kparams["wt"], kparams["bt"]]
               + [kparams[f"mp{i}"] for i in range(n_win)]
               + [kparams["wsp"], kparams["bsp"], kparams["ms"],
                  kparams["whf"], kparams["bhf"], kparams["wof"], kparams["bof"]])
    n_out = kparams["bof"].shape[-1]

    def _const_map(nd):
        return lambda b: (0,) * nd

    in_specs = [pl.BlockSpec((1,) + patches.shape[1:], lambda b: (b, 0, 0))]
    in_specs += [pl.BlockSpec(w.shape, _const_map(w.ndim)) for w in weights]

    out = pl.pallas_call(
        functools.partial(_tsception_kernel, n_windows=n_win),
        grid=(B,),
        in_specs=in_specs,
        out_specs=pl.BlockSpec((1, 1, n_out), lambda b: (b, 0, 0)),
        out_shape=jax.ShapeDtypeStruct((B, 1, n_out), jnp.float32),
        compiler_params=pltpu.CompilerParams(
            dimension_semantics=("parallel",)),
    )(patches, *weights)
    return out.reshape(B, n_out)


# ---------------------------------------------------------------------------
# One-time parameter preparation: BN folding + matmul operand construction.
# ---------------------------------------------------------------------------
def prepare_kernel_params(raw, *, n_chans, n_times, pool, kernel_widths):
    C, T = n_chans, n_times
    ft = raw["w_t0"].shape[0]
    fs = raw["w_s1"].shape[0]
    c2 = raw["w_s2"].shape[2]
    h2 = (C - c2) // c2 + 1
    pool_s = pool // 4
    t_pad = T
    k_tot = sum(kernel_widths)

    rows_real = C * ft                      # real rows per inception window (channel, filter)
    rows_pad = ((rows_real + 7) // 8) * 8   # sublane-aligned row block per window

    # Block-diagonal temporal conv weight: rows ordered (window, channel, filter),
    # each window block zero-padded to `rows_pad` rows for aligned in-kernel slices.
    row_blocks, bias_rows = [], []
    col_off = 0
    for i, K in enumerate(kernel_widths):
        w, b = raw[f"w_t{i}"], raw[f"b_t{i}"]
        blk = jnp.kron(jnp.eye(C, dtype=w.dtype), w)                 # (C*Ft, C*K)
        blk = jnp.pad(blk, ((0, rows_pad - rows_real),
                            (col_off, C * k_tot - col_off - C * K)))
        row_blocks.append(blk)
        bias_rows.append(jnp.pad(jnp.tile(b, C), (0, rows_pad - rows_real)))
        col_off += C * K
    kp = {"wt": jnp.concatenate(row_blocks, axis=0),                 # (W*rows_pad, C*K_tot)
          "bt": jnp.concatenate(bias_rows)[:, None]}                 # (W*rows_pad, 1)

    # Temporal AvgPool matrices (floor behaviour), one per inception window.
    t_pools = []
    j = jnp.arange(t_pad)[:, None]
    for i, K in enumerate(kernel_widths):
        tp_i = (T - K + 1) // pool
        t_pools.append(tp_i)
        tp = jnp.arange(tp_i)[None, :]
        kp[f"mp{i}"] = jnp.where(j // pool == tp, 1.0 / pool, 0.0).astype(jnp.float32)

    # Temporal BatchNorm (eval) folded into the Sception conv weights/biases.
    sc_t = raw["gamma_t"] / jnp.sqrt(raw["var_t"] + BN_EPS)
    sh_t = raw["beta_t"] - raw["mean_t"] * sc_t
    w1, w2 = raw["w_s1"], raw["w_s2"]                                # (Fs, Ft, C), (Fs, Ft, c2)
    w1f = (w1 * sc_t[None, :, None]).transpose(0, 2, 1).reshape(fs, C * ft)
    w1f = jnp.pad(w1f, ((0, 0), (0, rows_pad - rows_real)))
    w2f = (w2 * sc_t[None, :, None]).transpose(0, 2, 1).reshape(fs, c2 * ft)
    b1f = raw["b_s1"] + (w1 * sh_t[None, :, None]).sum(axis=(1, 2))
    b2f = raw["b_s2"] + (w2 * sh_t[None, :, None]).sum(axis=(1, 2))
    sp_rows = [w1f]
    for h in range(h2):
        left = h * c2 * ft
        sp_rows.append(jnp.pad(w2f, ((0, 0), (left, rows_pad - left - c2 * ft))))
    kp["wsp"] = jnp.concatenate(sp_rows, axis=0)                     # ((1+H2)*Fs, rows_pad)
    kp["bsp"] = jnp.concatenate([b1f] + [b2f] * h2)[:, None]

    # Spatial AvgPool matrix.
    t_total = sum(t_pools)
    t_sp = t_total // pool_s
    jj = jnp.arange(t_total)[:, None]
    tp = jnp.arange(t_sp)[None, :]
    kp["ms"] = jnp.where(jj // pool_s == tp, 1.0 / pool_s, 0.0).astype(jnp.float32)

    # Spatial BatchNorm (eval) folded into the dense head; weight rows permuted to the
    # kernel's feature order (h, s, tp).
    sc_s = raw["gamma_s"] / jnp.sqrt(raw["var_s"] + BN_EPS)
    sh_s = raw["beta_s"] - raw["mean_s"] * sc_s
    hidden = raw["w_h"].shape[0]
    wh4 = raw["w_h"].reshape(hidden, fs, 1 + h2, t_sp)               # [j, s, h, tp]
    kp["whf"] = ((wh4 * sc_s[None, :, None, None])
                 .transpose(2, 1, 3, 0)
                 .reshape((1 + h2) * fs * t_sp, hidden))
    kp["bhf"] = (raw["b_h"] + (wh4 * sh_s[None, :, None, None]).sum(axis=(1, 2, 3)))[None, :]
    kp["wof"] = raw["w_o"].T
    kp["bof"] = raw["b_o"][None, :]
    return kp


# ---------------------------------------------------------------------------
# Raw (PyTorch-layout) parameters + pure-JAX reference for validation.
# ---------------------------------------------------------------------------
def init_raw_params(key, *, n_chans, n_times, sfreq, windows, pool,
                    n_filt_t, n_filt_s, hidden, n_outputs):
    kernel_widths = [int(w * sfreq) for w in windows]
    c2 = max(1, n_chans // 2)
    h2 = (n_chans - c2) // c2 + 1
    keys = iter(jax.random.split(key, 32))

    def nrm(shape, scale=0.1):
        return scale * jax.random.normal(next(keys), shape, jnp.float32)

    p = {}
    for i, K in enumerate(kernel_widths):
        p[f"w_t{i}"] = nrm((n_filt_t, K))
        p[f"b_t{i}"] = nrm((n_filt_t,))
    p["gamma_t"] = 1.0 + nrm((n_filt_t,))
    p["beta_t"] = nrm((n_filt_t,))
    p["mean_t"] = nrm((n_filt_t,), 0.05)
    p["var_t"] = jnp.abs(1.0 + nrm((n_filt_t,)))
    p["w_s1"] = nrm((n_filt_s, n_filt_t, n_chans))
    p["b_s1"] = nrm((n_filt_s,))
    p["w_s2"] = nrm((n_filt_s, n_filt_t, c2))
    p["b_s2"] = nrm((n_filt_s,))
    p["gamma_s"] = 1.0 + nrm((n_filt_s,))
    p["beta_s"] = nrm((n_filt_s,))
    p["mean_s"] = nrm((n_filt_s,), 0.05)
    p["var_s"] = jnp.abs(1.0 + nrm((n_filt_s,)))
    t_sp = sum((n_times - K + 1) // pool for K in kernel_widths) // (pool // 4)
    feature = n_filt_s * (1 + h2) * t_sp
    p["w_h"] = nrm((hidden, feature))
    p["b_h"] = nrm((hidden,))
    p["w_o"] = nrm((n_outputs, hidden))
    p["b_o"] = nrm((n_outputs,))
    return p, kernel_widths, c2, h2


def tsception_reference(raw, x, *, kernel_widths, pool, c2, h2):
    """Straightforward JAX transcription of the PyTorch forward (eval mode)."""
    B, C, T = x.shape
    ft = raw["w_t0"].shape[0]
    fs = raw["w_s1"].shape[0]
    pool_s = pool // 4

    t_feats = []
    for i, K in enumerate(kernel_widths):
        w, b = raw[f"w_t{i}"], raw[f"b_t{i}"]
        t_out = T - K + 1
        patches = jnp.stack([x[:, :, k:k + t_out] for k in range(K)], axis=-1)
        conv = jnp.einsum('bcjk,fk->bfcj', patches, w) + b[None, :, None, None]
        act = _leaky(conv)
        tp = t_out // pool
        t_feats.append(act[..., :tp * pool].reshape(B, ft, C, tp, pool).mean(-1))
    t_cat = jnp.concatenate(t_feats, axis=-1)

    sc_t = raw["gamma_t"] / jnp.sqrt(raw["var_t"] + BN_EPS)
    sh_t = raw["beta_t"] - raw["mean_t"] * sc_t
    t_cat = t_cat * sc_t[None, :, None, None] + sh_t[None, :, None, None]

    t_total = t_cat.shape[-1]
    t_sp = t_total // pool_s

    s1 = _leaky(jnp.einsum('bfct,sfc->bst', t_cat, raw["w_s1"])
                + raw["b_s1"][None, :, None])[:, :, None, :]
    s1 = s1[..., :t_sp * pool_s].reshape(B, fs, 1, t_sp, pool_s).mean(-1)

    strips = []
    for h in range(h2):
        seg = t_cat[:, :, h * c2:(h + 1) * c2, :]
        strips.append(_leaky(jnp.einsum('bfct,sfc->bst', seg, raw["w_s2"])
                             + raw["b_s2"][None, :, None]))
    s2 = jnp.stack(strips, axis=2)
    s2 = s2[..., :t_sp * pool_s].reshape(B, fs, h2, t_sp, pool_s).mean(-1)

    s_out = jnp.concatenate([s1, s2], axis=2)
    sc_s = raw["gamma_s"] / jnp.sqrt(raw["var_s"] + BN_EPS)
    sh_s = raw["beta_s"] - raw["mean_s"] * sc_s
    s_out = s_out * sc_s[None, :, None, None] + sh_s[None, :, None, None]

    feat = s_out.reshape(B, -1)
    hid = _leaky(feat @ raw["w_h"].T + raw["b_h"][None, :])
    return hid @ raw["w_o"].T + raw["b_o"][None, :]


if __name__ == "__main__":
    B, C, T = 2, 4, 128          # batch, n_chans, n_times
    SFREQ = 32.0                 # -> temporal kernel widths 16, 8, 4
    POOL = 8
    FT, FS = 9, 6                # number_filter_temp, number_filter_spat (defaults)
    HIDDEN = 32
    N_OUT = 3
    WINDOWS = (0.5, 0.25, 0.125)

    key = jax.random.PRNGKey(0)
    kx, kparams_key = jax.random.split(key)
    x = jax.random.normal(kx, (B, C, T), jnp.float32)

    raw, kernel_widths, c2, h2 = init_raw_params(
        kparams_key, n_chans=C, n_times=T, sfreq=SFREQ, windows=WINDOWS, pool=POOL,
        n_filt_t=FT, n_filt_s=FS, hidden=HIDDEN, n_outputs=N_OUT)

    # One-time weight folding (outside the jitted hot path).
    kparams = prepare_kernel_params(raw, n_chans=C, n_times=T, pool=POOL,
                                    kernel_widths=kernel_widths)

    fwd = jax.jit(functools.partial(tsception_forward,
                                    kernel_widths=tuple(kernel_widths)))
    out = jax.block_until_ready(fwd(kparams, x))

    with jax.default_matmul_precision("highest"):
        ref = jax.block_until_ready(
            tsception_reference(raw, x, kernel_widths=kernel_widths,
                                pool=POOL, c2=c2, h2=h2))

    assert out.shape == (B, N_OUT), out.shape
    assert bool(jnp.all(jnp.isfinite(out)))
    assert bool(jnp.allclose(out, ref, rtol=5e-3, atol=5e-3)), (out, ref)
    print("KERNEL_OK")
</pallas_src>

<mosaic_0001>
module attributes {stable_mosaic.version = 11 : i64} {
  func.func @_tsception_kernel(%arg0: i32, %arg1: memref<1x112x128xf32, #tpu.memory_space<vmem>>, %arg2: memref<120x112xf32, #tpu.memory_space<vmem>>, %arg3: memref<120x1xf32, #tpu.memory_space<vmem>>, %arg4: memref<128x14xf32, #tpu.memory_space<vmem>>, %arg5: memref<128x15xf32, #tpu.memory_space<vmem>>, %arg6: memref<128x15xf32, #tpu.memory_space<vmem>>, %arg7: memref<18x40xf32, #tpu.memory_space<vmem>>, %arg8: memref<18x1xf32, #tpu.memory_space<vmem>>, %arg9: memref<44x22xf32, #tpu.memory_space<vmem>>, %arg10: memref<396x32xf32, #tpu.memory_space<vmem>>, %arg11: memref<1x32xf32, #tpu.memory_space<vmem>>, %arg12: memref<32x3xf32, #tpu.memory_space<vmem>>, %arg13: memref<1x3xf32, #tpu.memory_space<vmem>>, %arg14: memref<1x1x3xf32, #tpu.memory_space<vmem>>) attributes {dimension_semantics = [#tpu.dimension_semantics<parallel>], iteration_bounds = array<i64: 2>, scalar_prefetch = 0 : i64, scratch_operands = 0 : i64, tpu.core_type = #tpu.core_type<tc>, window_params = [{transform_indices = @transform_0, window_bounds = array<i64: 1, 112, 128>}, {pipeline_mode = #tpu.pipeline_mode<synchronous>, transform_indices = @transform_1, window_bounds = array<i64: 120, 112>}, {pipeline_mode = #tpu.pipeline_mode<synchronous>, transform_indices = @transform_2, window_bounds = array<i64: 120, 1>}, {pipeline_mode = #tpu.pipeline_mode<synchronous>, transform_indices = @transform_3, window_bounds = array<i64: 128, 14>}, {pipeline_mode = #tpu.pipeline_mode<synchronous>, transform_indices = @transform_4, window_bounds = array<i64: 128, 15>}, {pipeline_mode = #tpu.pipeline_mode<synchronous>, transform_indices = @transform_5, window_bounds = array<i64: 128, 15>}, {pipeline_mode = #tpu.pipeline_mode<synchronous>, transform_indices = @transform_6, window_bounds = array<i64: 18, 40>}, {pipeline_mode = #tpu.pipeline_mode<synchronous>, transform_indices = @transform_7, window_bounds = array<i64: 18, 1>}, {pipeline_mode = #tpu.pipeline_mode<synchronous>, transform_indices = @transform_8, window_bounds = array<i64: 44, 22>}, {pipeline_mode = #tpu.pipeline_mode<synchronous>, transform_indices = @transform_9, window_bounds = array<i64: 396, 32>}, {pipeline_mode = #tpu.pipeline_mode<synchronous>, transform_indices = @transform_10, window_bounds = array<i64: 1, 32>}, {pipeline_mode = #tpu.pipeline_mode<synchronous>, transform_indices = @transform_11, window_bounds = array<i64: 32, 3>}, {pipeline_mode = #tpu.pipeline_mode<synchronous>, transform_indices = @transform_12, window_bounds = array<i64: 1, 3>}, {transform_indices = @transform_13, window_bounds = array<i64: 1, 1, 3>}]} {
    %c0 = arith.constant 0 : index
    %c0_0 = arith.constant 0 : index
    %c0_1 = arith.constant 0 : index
    %0 = vector.load %arg1[%c0, %c0_0, %c0_1] : memref<1x112x128xf32, #tpu.memory_space<vmem>>, vector<1x112x128xf32>
    %1 = vector.shape_cast %0 : vector<1x112x128xf32> to vector<112x128xf32>
    %c0_2 = arith.constant 0 : index
    %c0_3 = arith.constant 0 : index
    %2 = vector.load %arg2[%c0_2, %c0_3] : memref<120x112xf32, #tpu.memory_space<vmem>>, vector<120x112xf32>
    %cst = arith.constant dense<0.000000e+00> : vector<120x128xf32>
    %3 = tpu.matmul %2, %1, %cst {dimension_numbers = #tpu.dot_dimension_numbers<[1], [0], [0], [1], [0, 0, 1, 1], [], []>} : vector<120x112xf32>, vector<112x128xf32>, vector<120x128xf32> -> vector<120x128xf32>
    %c0_4 = arith.constant 0 : index
    %c0_5 = arith.constant 0 : index
    %4 = vector.load %arg3[%c0_4, %c0_5] : memref<120x1xf32, #tpu.memory_space<vmem>>, vector<120x1xf32>
    %5 = vector.broadcast %4 : vector<120x1xf32> to vector<120x128xf32>
    %6 = arith.addf %3, %5 : vector<120x128xf32>
    %cst_6 = arith.constant 0.000000e+00 : f32
    %7 = vector.broadcast %cst_6 : f32 to vector<120x128xf32>
    %8 = arith.cmpf oge, %6, %7 : vector<120x128xf32>
    %cst_7 = arith.constant 0.00999999977 : f32
    %9 = vector.broadcast %cst_7 : f32 to vector<120x128xf32>
    %10 = arith.mulf %9, %6 : vector<120x128xf32>
    %11 = arith.select %8, %6, %10 : vector<120x128xi1>, vector<120x128xf32>
    %12 = vector.extract_strided_slice %11 {offsets = [0, 0], sizes = [40, 128], strides = [1, 1]} : vector<120x128xf32> to vector<40x128xf32>
    %c0_8 = arith.constant 0 : index
    %c0_9 = arith.constant 0 : index
    %13 = vector.load %arg4[%c0_8, %c0_9] : memref<128x14xf32, #tpu.memory_space<vmem>>, vector<128x14xf32>
    %cst_10 = arith.constant dense<0.000000e+00> : vector<40x14xf32>
    %14 = tpu.matmul %12, %13, %cst_10 {dimension_numbers = #tpu.dot_dimension_numbers<[1], [0], [0], [1], [0, 0, 1, 1], [], []>} : vector<40x128xf32>, vector<128x14xf32>, vector<40x14xf32> -> vector<40x14xf32>
    %15 = vector.extract_strided_slice %11 {offsets = [40, 0], sizes = [40, 128], strides = [1, 1]} : vector<120x128xf32> to vector<40x128xf32>
    %c0_11 = arith.constant 0 : index
    %c0_12 = arith.constant 0 : index
    %16 = vector.load %arg5[%c0_11, %c0_12] : memref<128x15xf32, #tpu.memory_space<vmem>>, vector<128x15xf32>
    %cst_13 = arith.constant dense<0.000000e+00> : vector<40x15xf32>
    %17 = tpu.matmul %15, %16, %cst_13 {dimension_numbers = #tpu.dot_dimension_numbers<[1], [0], [0], [1], [0, 0, 1, 1], [], []>} : vector<40x128xf32>, vector<128x15xf32>, vector<40x15xf32> -> vector<40x15xf32>
    %18 = vector.extract_strided_slice %11 {offsets = [80, 0], sizes = [40, 128], strides = [1, 1]} : vector<120x128xf32> to vector<40x128xf32>
    %c0_14 = arith.constant 0 : index
    %c0_15 = arith.constant 0 : index
    %19 = vector.load %arg6[%c0_14, %c0_15] : memref<128x15xf32, #tpu.memory_space<vmem>>, vector<128x15xf32>
    %cst_16 = arith.constant dense<0.000000e+00> : vector<40x15xf32>
    %20 = tpu.matmul %18, %19, %cst_16 {dimension_numbers = #tpu.dot_dimension_numbers<[1], [0], [0], [1], [0, 0, 1, 1], [], []>} : vector<40x128xf32>, vector<128x15xf32>, vector<40x15xf32> -> vector<40x15xf32>
    %21 = tpu.concatenate %14, %17, %20 in 1 : vector<40x14xf32>, vector<40x15xf32>, vector<40x15xf32> -> vector<40x44xf32>
    %c0_17 = arith.constant 0 : index
    %c0_18 = arith.constant 0 : index
    %22 = vector.load %arg7[%c0_17, %c0_18] : memref<18x40xf32, #tpu.memory_space<vmem>>, vector<18x40xf32>
    %cst_19 = arith.constant dense<0.000000e+00> : vector<18x44xf32>
    %23 = tpu.matmul %22, %21, %cst_19 {dimension_numbers = #tpu.dot_dimension_numbers<[1], [0], [0], [1], [0, 0, 1, 1], [], []>} : vector<18x40xf32>, vector<40x44xf32>, vector<18x44xf32> -> vector<18x44xf32>
    %c0_20 = arith.constant 0 : index
    %c0_21 = arith.constant 0 : index
    %24 = vector.load %arg8[%c0_20, %c0_21] : memref<18x1xf32, #tpu.memory_space<vmem>>, vector<18x1xf32>
    %25 = vector.broadcast %24 : vector<18x1xf32> to vector<18x44xf32>
    %26 = arith.addf %23, %25 : vector<18x44xf32>
    %cst_22 = arith.constant 0.000000e+00 : f32
    %27 = vector.broadcast %cst_22 : f32 to vector<18x44xf32>
    %28 = arith.cmpf oge, %26, %27 : vector<18x44xf32>
    %cst_23 = arith.constant 0.00999999977 : f32
    %29 = vector.broadcast %cst_23 : f32 to vector<18x44xf32>
    %30 = arith.mulf %29, %26 : vector<18x44xf32>
    %31 = arith.select %28, %26, %30 : vector<18x44xi1>, vector<18x44xf32>
    %c0_24 = arith.constant 0 : index
    %c0_25 = arith.constant 0 : index
    %32 = vector.load %arg9[%c0_24, %c0_25] : memref<44x22xf32, #tpu.memory_space<vmem>>, vector<44x22xf32>
    %cst_26 = arith.constant dense<0.000000e+00> : vector<18x22xf32>
    %33 = tpu.matmul %31, %32, %cst_26 {dimension_numbers = #tpu.dot_dimension_numbers<[1], [0], [0], [1], [0, 0, 1, 1], [], []>} : vector<18x44xf32>, vector<44x22xf32>, vector<18x22xf32> -> vector<18x22xf32>
    %34 = vector.extract_strided_slice %33 {offsets = [0, 0], sizes = [1, 22], strides = [1, 1]} : vector<18x22xf32> to vector<1x22xf32>
    %35 = vector.extract_strided_slice %33 {offsets = [1, 0], sizes = [1, 22], strides = [1, 1]} : vector<18x22xf32> to vector<1x22xf32>
    %36 = vector.extract_strided_slice %33 {offsets = [2, 0], sizes = [1, 22], strides = [1, 1]} : vector<18x22xf32> to vector<1x22xf32>
    %37 = vector.extract_strided_slice %33 {offsets = [3, 0], sizes = [1, 22], strides = [1, 1]} : vector<18x22xf32> to vector<1x22xf32>
    %38 = vector.extract_strided_slice %33 {offsets = [4, 0], sizes = [1, 22], strides = [1, 1]} : vector<18x22xf32> to vector<1x22xf32>
    %39 = vector.extract_strided_slice %33 {offsets = [5, 0], sizes = [1, 22], strides = [1, 1]} : vector<18x22xf32> to vector<1x22xf32>
    %40 = vector.extract_strided_slice %33 {offsets = [6, 0], sizes = [1, 22], strides = [1, 1]} : vector<18x22xf32> to vector<1x22xf32>
    %41 = vector.extract_strided_slice %33 {offsets = [7, 0], sizes = [1, 22], strides = [1, 1]} : vector<18x22xf32> to vector<1x22xf32>
    %42 = vector.extract_strided_slice %33 {offsets = [8, 0], sizes = [1, 22], strides = [1, 1]} : vector<18x22xf32> to vector<1x22xf32>
    %43 = vector.extract_strided_slice %33 {offsets = [9, 0], sizes = [1, 22], strides = [1, 1]} : vector<18x22xf32> to vector<1x22xf32>
    %44 = vector.extract_strided_slice %33 {offsets = [10, 0], sizes = [1, 22], strides = [1, 1]} : vector<18x22xf32> to vector<1x22xf32>
    %45 = vector.extract_strided_slice %33 {offsets = [11, 0], sizes = [1, 22], strides = [1, 1]} : vector<18x22xf32> to vector<1x22xf32>
    %46 = vector.extract_strided_slice %33 {offsets = [12, 0], sizes = [1, 22], strides = [1, 1]} : vector<18x22xf32> to vector<1x22xf32>
    %47 = vector.extract_strided_slice %33 {offsets = [13, 0], sizes = [1, 22], strides = [1, 1]} : vector<18x22xf32> to vector<1x22xf32>
    %48 = vector.extract_strided_slice %33 {offsets = [14, 0], sizes = [1, 22], strides = [1, 1]} : vector<18x22xf32> to vector<1x22xf32>
    %49 = vector.extract_strided_slice %33 {offsets = [15, 0], sizes = [1, 22], strides = [1, 1]} : vector<18x22xf32> to vector<1x22xf32>
    %50 = vector.extract_strided_slice %33 {offsets = [16, 0], sizes = [1, 22], strides = [1, 1]} : vector<18x22xf32> to vector<1x22xf32>
    %51 = vector.extract_strided_slice %33 {offsets = [17, 0], sizes = [1, 22], strides = [1, 1]} : vector<18x22xf32> to vector<1x22xf32>
    %52 = tpu.concatenate %34, %35, %36, %37, %38, %39, %40, %41, %42, %43, %44, %45, %46, %47, %48, %49 in 1 : vector<1x22xf32>, vector<1x22xf32>, vector<1x22xf32>, vector<1x22xf32>, vector<1x22xf32>, vector<1x22xf32>, vector<1x22xf32>, vector<1x22xf32>, vector<1x22xf32>, vector<1x22xf32>, vector<1x22xf32>, vector<1x22xf32>, vector<1x22xf32>, vector<1x22xf32>, vector<1x22xf32>, vector<1x22xf32> -> vector<1x352xf32>
    %53 = tpu.concatenate %50, %51 in 1 : vector<1x22xf32>, vector<1x22xf32> -> vector<1x44xf32>
    %54 = tpu.concatenate %52, %53 in 1 : vector<1x352xf32>, vector<1x44xf32> -> vector<1x396xf32>
    %c0_27 = arith.constant 0 : index
    %c0_28 = arith.constant 0 : index
    %55 = vector.load %arg10[%c0_27, %c0_28] : memref<396x32xf32, #tpu.memory_space<vmem>>, vector<396x32xf32>
    %cst_29 = arith.constant dense<0.000000e+00> : vector<1x32xf32>
    %56 = tpu.matmul %54, %55, %cst_29 {dimension_numbers = #tpu.dot_dimension_numbers<[1], [0], [0], [1], [0, 0, 1, 1], [], []>} : vector<1x396xf32>, vector<396x32xf32>, vector<1x32xf32> -> vector<1x32xf32>
    %c0_30 = arith.constant 0 : index
    %c0_31 = arith.constant 0 : index
    %57 = vector.load %arg11[%c0_30, %c0_31] : memref<1x32xf32, #tpu.memory_space<vmem>>, vector<1x32xf32>
    %58 = arith.addf %56, %57 : vector<1x32xf32>
    %cst_32 = arith.constant 0.000000e+00 : f32
    %59 = vector.broadcast %cst_32 : f32 to vector<1x32xf32>
    %60 = arith.cmpf oge, %58, %59 : vector<1x32xf32>
    %cst_33 = arith.constant 0.00999999977 : f32
    %61 = vector.broadcast %cst_33 : f32 to vector<1x32xf32>
    %62 = arith.mulf %61, %58 : vector<1x32xf32>
    %63 = arith.select %60, %58, %62 : vector<1x32xi1>, vector<1x32xf32>
    %c0_34 = arith.constant 0 : index
    %c0_35 = arith.constant 0 : index
    %64 = vector.load %arg12[%c0_34, %c0_35] : memref<32x3xf32, #tpu.memory_space<vmem>>, vector<32x3xf32>
    %cst_36 = arith.constant dense<0.000000e+00> : vector<1x3xf32>
    %65 = tpu.matmul %63, %64, %cst_36 {dimension_numbers = #tpu.dot_dimension_numbers<[1], [0], [0], [1], [0, 0, 1, 1], [], []>} : vector<1x32xf32>, vector<32x3xf32>, vector<1x3xf32> -> vector<1x3xf32>
    %c0_37 = arith.constant 0 : index
    %c0_38 = arith.constant 0 : index
    %66 = vector.load %arg13[%c0_37, %c0_38] : memref<1x3xf32, #tpu.memory_space<vmem>>, vector<1x3xf32>
    %67 = arith.addf %65, %66 : vector<1x3xf32>
    %c0_39 = arith.constant 0 : index
    %c0_40 = arith.constant 0 : index
    %c0_41 = arith.constant 0 : index
    %68 = vector.load %arg14[%c0_39, %c0_40, %c0_41] : memref<1x1x3xf32, #tpu.memory_space<vmem>>, vector<1x1x3xf32>
    %69 = vector.shape_cast %68 : vector<1x1x3xf32> to vector<1x3xf32>
    %70 = vector.shape_cast %67 : vector<1x3xf32> to vector<1x1x3xf32>
    tpu.vector_store %arg14[%c0_39, %c0_40, %c0_41], %70 {strides = array<i32>} : memref<1x1x3xf32, #tpu.memory_space<vmem>>, vector<1x1x3xf32>,
    return
  }
  func.func @transform_0(%arg0: i32) -> (i32, i32, i32) {
    %c0_i32 = arith.constant 0 : i32
    %c0_i32_0 = arith.constant 0 : i32
    %c0_i32_1 = arith.constant 0 : i32
    return %arg0, %c0_i32, %c0_i32_0 : i32, i32, i32
  }
  func.func @transform_1(%arg0: i32) -> (i32, i32) {
    %c0_i32 = arith.constant 0 : i32
    %c0_i32_0 = arith.constant 0 : i32
    %c0_i32_1 = arith.constant 0 : i32
    return %c0_i32, %c0_i32_0 : i32, i32
  }
  func.func @transform_2(%arg0: i32) -> (i32, i32) {
    %c0_i32 = arith.constant 0 : i32
    %c0_i32_0 = arith.constant 0 : i32
    %c0_i32_1 = arith.constant 0 : i32
    return %c0_i32, %c0_i32_0 : i32, i32
  }
  func.func @transform_3(%arg0: i32) -> (i32, i32) {
    %c0_i32 = arith.constant 0 : i32
    %c0_i32_0 = arith.constant 0 : i32
    %c0_i32_1 = arith.constant 0 : i32
    return %c0_i32, %c0_i32_0 : i32, i32
  }
  func.func @transform_4(%arg0: i32) -> (i32, i32) {
    %c0_i32 = arith.constant 0 : i32
    %c0_i32_0 = arith.constant 0 : i32
    %c0_i32_1 = arith.constant 0 : i32
    return %c0_i32, %c0_i32_0 : i32, i32
  }
  func.func @transform_5(%arg0: i32) -> (i32, i32) {
    %c0_i32 = arith.constant 0 : i32
    %c0_i32_0 = arith.constant 0 : i32
    %c0_i32_1 = arith.constant 0 : i32
    return %c0_i32, %c0_i32_0 : i32, i32
  }
  func.func @transform_6(%arg0: i32) -> (i32, i32) {
    %c0_i32 = arith.constant 0 : i32
    %c0_i32_0 = arith.constant 0 : i32
    %c0_i32_1 = arith.constant 0 : i32
    return %c0_i32, %c0_i32_0 : i32, i32
  }
  func.func @transform_7(%arg0: i32) -> (i32, i32) {
    %c0_i32 = arith.constant 0 : i32
    %c0_i32_0 = arith.constant 0 : i32
    %c0_i32_1 = arith.constant 0 : i32
    return %c0_i32, %c0_i32_0 : i32, i32
  }
  func.func @transform_8(%arg0: i32) -> (i32, i32) {
    %c0_i32 = arith.constant 0 : i32
    %c0_i32_0 = arith.constant 0 : i32
    %c0_i32_1 = arith.constant 0 : i32
    return %c0_i32, %c0_i32_0 : i32, i32
  }
  func.func @transform_9(%arg0: i32) -> (i32, i32) {
    %c0_i32 = arith.constant 0 : i32
    %c0_i32_0 = arith.constant 0 : i32
    %c0_i32_1 = arith.constant 0 : i32
    return %c0_i32, %c0_i32_0 : i32, i32
  }
  func.func @transform_10(%arg0: i32) -> (i32, i32) {
    %c0_i32 = arith.constant 0 : i32
    %c0_i32_0 = arith.constant 0 : i32
    %c0_i32_1 = arith.constant 0 : i32
    return %c0_i32, %c0_i32_0 : i32, i32
  }
  func.func @transform_11(%arg0: i32) -> (i32, i32) {
    %c0_i32 = arith.constant 0 : i32
    %c0_i32_0 = arith.constant 0 : i32
    %c0_i32_1 = arith.constant 0 : i32
    return %c0_i32, %c0_i32_0 : i32, i32
  }
  func.func @transform_12(%arg0: i32) -> (i32, i32) {
    %c0_i32 = arith.constant 0 : i32
    %c0_i32_0 = arith.constant 0 : i32
    %c0_i32_1 = arith.constant 0 : i32
    return %c0_i32, %c0_i32_0 : i32, i32
  }
  func.func @transform_13(%arg0: i32) -> (i32, i32, i32) {
    %c0_i32 = arith.constant 0 : i32
    %c0_i32_0 = arith.constant 0 : i32
    %c0_i32_1 = arith.constant 0 : i32
    return %arg0, %c0_i32, %c0_i32_0 : i32, i32, i32
  }
}

</mosaic_0001>

<llo_original>
// kernel: tsception_forward.1
$region0: #{tsception_forward.1}
  #allocation0 [shape = 'u32[]', space=smem, size = 0x4, offset = 0x4, fixed_abs, tag = 'smem constant byte address 0x4 - core index']
  #allocation1 [shape = 'u32[144,128]{1,0:T(1,128)}', space=vmem, size = 0x12000, scoped, tag = 'internal scratch']
  %s0 = inlined_call_operand.vmem [shape: f32[2,112,128], index: 0, kind: input, shape index: {}]
  %s1 = inlined_call_operand.vmem [shape: f32[120,112], index: 1, kind: input, shape index: {}]
  %s2 = inlined_call_operand.vmem [shape: f32[120,1], index: 2, kind: input, shape index: {}]
  %s3 = inlined_call_operand.vmem [shape: f32[128,14], index: 3, kind: input, shape index: {}]
  %s4 = inlined_call_operand.vmem [shape: f32[128,15], index: 4, kind: input, shape index: {}]
  %s5 = inlined_call_operand.vmem [shape: f32[128,15], index: 5, kind: input, shape index: {}]
  %s6 = inlined_call_operand.vmem [shape: f32[18,40], index: 6, kind: input, shape index: {}]
  %s7 = inlined_call_operand.vmem [shape: f32[18,1], index: 7, kind: input, shape index: {}]
  %s8 = inlined_call_operand.vmem [shape: f32[44,22], index: 8, kind: input, shape index: {}]
  %s9 = inlined_call_operand.vmem [shape: f32[396,32], index: 9, kind: input, shape index: {}]
  %s10 = inlined_call_operand.vmem [shape: f32[1,32], index: 10, kind: input, shape index: {}]
  %s11 = inlined_call_operand.vmem [shape: f32[32,3], index: 11, kind: input, shape index: {}]
  %s12 = inlined_call_operand.vmem [shape: f32[1,3], index: 12, kind: input, shape index: {}]
  %s13 = inlined_call_operand.hbm [shape: f32[2,1,3], index: 13, kind: output, shape index: {}]
  %s14 = sld [smem:[#allocation0]]
  $region85: #{tsception_forward.1} parent=0
    _
  %s16 = ssub.s32 1, %s14
  %s17 = scalar_select 0, %s16, %s14
  $region1: #{tsception_forward.1} parent=0
    #allocation2 [shape = 'u8[1024]{0}', space=vmem, size = 0x400, scoped, tag = 'output window, operand 0']
    #allocation3 [shape = 's32[2]{0}', space=sflag, size = 0x8, scoped, tag = 'scoped memory for tsception_forward.1']
    %18 = vsyncpa [#allocation3], 0
    %s19 = scalar_lea.sflag [#allocation3], 1
    %20 = vsyncpa %s19, 0
    loop: start=0, step=1, limit=4
    $region2: #{tsception_forward.1} parent=1 // loop_pre_header
      _
    $region3: #{tsception_forward.1} parent=1 // loop_header
      %s22 = sphi 0, %s26
      %p23 = scmp.ge.s32.totalorder %s22, 4
      %s32 = sphi 0, %s34
      %s35 = sphi 0, %s32
      %s36 = sphi 0, %s35
      %s52 = sphi 0, %s36
      %s56 = sphi 0, %s56
      %s58 = sphi 0, %s56
      %s59 = sphi 0, %s58
      %s73 = sphi 0, %s59
      %s77 = sphi 0, %s77
      %s79 = sphi 0, %s77
      %s80 = sphi 0, %s79
      %s94 = sphi 0, %s80
      %s98 = sphi 0, %s98
      %s100 = sphi 0, %s98
      %s101 = sphi 0, %s100
      %s115 = sphi 0, %s101
      %s119 = sphi 0, %s119
      %s121 = sphi 0, %s119
      %s122 = sphi 0, %s121
      %s136 = sphi 0, %s122
      %s140 = sphi 0, %s140
      %s142 = sphi 0, %s140
      %s143 = sphi 0, %s142
      %s157 = sphi 0, %s143
      %s161 = sphi 0, %s161
      %s163 = sphi 0, %s161
      %s164 = sphi 0, %s163
      %s178 = sphi 0, %s164
      %s182 = sphi 0, %s182
      %s184 = sphi 0, %s182
      %s185 = sphi 0, %s184
      %s199 = sphi 0, %s185
      %s203 = sphi 0, %s203
      %s205 = sphi 0, %s203
      %s206 = sphi 0, %s205
      %s220 = sphi 0, %s206
      %s224 = sphi 0, %s224
      %s226 = sphi 0, %s224
      %s227 = sphi 0, %s226
      %s241 = sphi 0, %s227
      %s245 = sphi 0, %s245
      %s247 = sphi 0, %s245
      %s248 = sphi 0, %s247
      %s262 = sphi 0, %s248
      %s266 = sphi 0, %s266
      %s268 = sphi 0, %s266
      %s269 = sphi 0, %s268
      %s283 = sphi 0, %s269
      %s287 = sphi 0, %s287
      %s289 = sphi 0, %s287
      %s290 = sphi 0, %s289
      %s304 = sphi 0, %s290
      %s310 = sphi 0, %s312
      %s313 = sphi 0, %s310
      %s314 = sphi 0, %s313
      %s330 = sphi 0, %s314
    $region4: #{tsception_forward.1} parent=1 // loop_header_branch
      %25 = sbr.rel (%p23) target = $region8
    $region5: #{tsception_forward.1} parent=1 // loop_body
      %s27 = ssub.s32 %s22, 1
      %s28 = ssub.s32 %s22, 2
      %s29 = sadd.s32 %s22, 1
      %s30 = ssub.s32 %s22, %s29
      %p31 = scmp.eq.s32.totalorder %s30, 0
      %s33 = sadd.s32 %s32, 1
      %s34 = scalar_select %p31, %s32, %s33
      %p37 = pneg %p31
      %p38 = scmp.eq.s32.totalorder %s22, 1
      %p39 = por %p37, %p38
      %p40 = scmp.ne.s32.totalorder %s32, %s35
      %p41 = scmp.eq.s32.totalorder %s22, 0
      %p42 = por %p40, %p41
      %p43 = scmp.ne.s32.totalorder %s32, %s35
      %p44 = scmp.eq.s32.totalorder %s27, 1
      %p45 = por %p43, %p44
      %p46 = scmp.ne.s32.totalorder %s35, %s36
      %p47 = scmp.eq.s32.totalorder %s27, 0
      %p48 = por %p46, %p47
      %p49 = scmp.ne.s32.totalorder %s35, %s36
      %p50 = scmp.eq.s32.totalorder %s28, 1
      %p51 = por %p49, %p50
      %p53 = scmp.ne.s32.totalorder %s36, %s52
      %p54 = scmp.eq.s32.totalorder %s28, 0
      %p55 = por %p53, %p54
      %s57 = sadd.s32 %s56, 1
      %p60 = scmp.eq.s32.totalorder %s22, 1
      %p61 = scmp.ne.s32.totalorder %s56, %s58
      %p62 = scmp.eq.s32.totalorder %s22, 0
      %p63 = por %p61, %p62
      %p64 = scmp.ne.s32.totalorder %s56, %s58
      %p65 = scmp.eq.s32.totalorder %s27, 1
      %p66 = por %p64, %p65
      %p67 = scmp.ne.s32.totalorder %s58, %s59
      %p68 = scmp.eq.s32.totalorder %s27, 0
      %p69 = por %p67, %p68
      %p70 = scmp.ne.s32.totalorder %s58, %s59
      %p71 = scmp.eq.s32.totalorder %s28, 1
      %p72 = por %p70, %p71
      %p74 = scmp.ne.s32.totalorder %s59, %s73
      %p75 = scmp.eq.s32.totalorder %s28, 0
      %p76 = por %p74, %p75
      %s78 = sadd.s32 %s77, 1
      %p81 = scmp.eq.s32.totalorder %s22, 1
      %p82 = scmp.ne.s32.totalorder %s77, %s79
      %p83 = scmp.eq.s32.totalorder %s22, 0
      %p84 = por %p82, %p83
      %p85 = scmp.ne.s32.totalorder %s77, %s79
      %p86 = scmp.eq.s32.totalorder %s27, 1
      %p87 = por %p85, %p86
      %p88 = scmp.ne.s32.totalorder %s79, %s80
      %p89 = scmp.eq.s32.totalorder %s27, 0
      %p90 = por %p88, %p89
      %p91 = scmp.ne.s32.totalorder %s79, %s80
      %p92 = scmp.eq.s32.totalorder %s28, 1
      %p93 = por %p91, %p92
      %p95 = scmp.ne.s32.totalorder %s80, %s94
      %p96 = scmp.eq.s32.totalorder %s28, 0
      %p97 = por %p95, %p96
      %s99 = sadd.s32 %s98, 1
      %p102 = scmp.eq.s32.totalorder %s22, 1
      %p103 = scmp.ne.s32.totalorder %s98, %s100
      %p104 = scmp.eq.s32.totalorder %s22, 0
      %p105 = por %p103, %p104
      %p106 = scmp.ne.s32.totalorder %s98, %s100
      %p107 = scmp.eq.s32.totalorder %s27, 1
      %p108 = por %p106, %p107
      %p109 = scmp.ne.s32.totalorder %s100, %s101
      %p110 = scmp.eq.s32.totalorder %s27, 0
      %p111 = por %p109, %p110
      %p112 = scmp.ne.s32.totalorder %s100, %s101
      %p113 = scmp.eq.s32.totalorder %s28, 1
      %p114 = por %p112, %p113
      %p116 = scmp.ne.s32.totalorder %s101, %s115
      %p117 = scmp.eq.s32.totalorder %s28, 0
      %p118 = por %p116, %p117
      %s120 = sadd.s32 %s119, 1
      %p123 = scmp.eq.s32.totalorder %s22, 1
      %p124 = scmp.ne.s32.totalorder %s119, %s121
      %p125 = scmp.eq.s32.totalorder %s22, 0
      %p126 = por %p124, %p125
      %p127 = scmp.ne.s32.totalorder %s119, %s121
      %p128 = scmp.eq.s32.totalorder %s27, 1
      %p129 = por %p127, %p128
      %p130 = scmp.ne.s32.totalorder %s121, %s122
      %p131 = scmp.eq.s32.totalorder %s27, 0
      %p132 = por %p130, %p131
      %p133 = scmp.ne.s32.totalorder %s121, %s122
      %p134 = scmp.eq.s32.totalorder %s28, 1
      %p135 = por %p133, %p134
      %p137 = scmp.ne.s32.totalorder %s122, %s136
      %p138 = scmp.eq.s32.totalorder %s28, 0
      %p139 = por %p137, %p138
      %s141 = sadd.s32 %s140, 1
      %p144 = scmp.eq.s32.totalorder %s22, 1
      %p145 = scmp.ne.s32.totalorder %s140, %s142
      %p146 = scmp.eq.s32.totalorder %s22, 0
      %p147 = por %p145, %p146
      %p148 = scmp.ne.s32.totalorder %s140, %s142
      %p149 = scmp.eq.s32.totalorder %s27, 1
      %p150 = por %p148, %p149
      %p151 = scmp.ne.s32.totalorder %s142, %s143
      %p152 = scmp.eq.s32.totalorder %s27, 0
      %p153 = por %p151, %p152
      %p154 = scmp.ne.s32.totalorder %s142, %s143
      %p155 = scmp.eq.s32.totalorder %s28, 1
      %p156 = por %p154, %p155
      %p158 = scmp.ne.s32.totalorder %s143, %s157
      %p159 = scmp.eq.s32.totalorder %s28, 0
      %p160 = por %p158, %p159
      %s162 = sadd.s32 %s161, 1
      %p165 = scmp.eq.s32.totalorder %s22, 1
      %p166 = scmp.ne.s32.totalorder %s161, %s163
      %p167 = scmp.eq.s32.totalorder %s22, 0
      %p168 = por %p166, %p167
      %p169 = scmp.ne.s32.totalorder %s161, %s163
      %p170 = scmp.eq.s32.totalorder %s27, 1
      %p171 = por %p169, %p170
      %p172 = scmp.ne.s32.totalorder %s163, %s164
      %p173 = scmp.eq.s32.totalorder %s27, 0
      %p174 = por %p172, %p173
      %p175 = scmp.ne.s32.totalorder %s163, %s164
      %p176 = scmp.eq.s32.totalorder %s28, 1
      %p177 = por %p175, %p176
      %p179 = scmp.ne.s32.totalorder %s164, %s178
      %p180 = scmp.eq.s32.totalorder %s28, 0
      %p181 = por %p179, %p180
      %s183 = sadd.s32 %s182, 1
      %p186 = scmp.eq.s32.totalorder %s22, 1
      %p187 = scmp.ne.s32.totalorder %s182, %s184
      %p188 = scmp.eq.s32.totalorder %s22, 0
      %p189 = por %p187, %p188
      %p190 = scmp.ne.s32.totalorder %s182, %s184
      %p191 = scmp.eq.s32.totalorder %s27, 1
      %p192 = por %p190, %p191
      %p193 = scmp.ne.s32.totalorder %s184, %s185
      %p194 = scmp.eq.s32.totalorder %s27, 0
      %p195 = por %p193, %p194
      %p196 = scmp.ne.s32.totalorder %s184, %s185
      %p197 = scmp.eq.s32.totalorder %s28, 1
      %p198 = por %p196, %p197
      %p200 = scmp.ne.s32.totalorder %s185, %s199
      %p201 = scmp.eq.s32.totalorder %s28, 0
      %p202 = por %p200, %p201
      %s204 = sadd.s32 %s203, 1
      %p207 = scmp.eq.s32.totalorder %s22, 1
      %p208 = scmp.ne.s32.totalorder %s203, %s205
      %p209 = scmp.eq.s32.totalorder %s22, 0
      %p210 = por %p208, %p209
      %p211 = scmp.ne.s32.totalorder %s203, %s205
      %p212 = scmp.eq.s32.totalorder %s27, 1
      %p213 = por %p211, %p212
      %p214 = scmp.ne.s32.totalorder %s205, %s206
      %p215 = scmp.eq.s32.totalorder %s27, 0
      %p216 = por %p214, %p215
      %p217 = scmp.ne.s32.totalorder %s205, %s206
      %p218 = scmp.eq.s32.totalorder %s28, 1
      %p219 = por %p217, %p218
      %p221 = scmp.ne.s32.totalorder %s206, %s220
      %p222 = scmp.eq.s32.totalorder %s28, 0
      %p223 = por %p221, %p222
      %s225 = sadd.s32 %s224, 1
      %p228 = scmp.eq.s32.totalorder %s22, 1
      %p229 = scmp.ne.s32.totalorder %s224, %s226
      %p230 = scmp.eq.s32.totalorder %s22, 0
      %p231 = por %p229, %p230
      %p232 = scmp.ne.s32.totalorder %s224, %s226
      %p233 = scmp.eq.s32.totalorder %s27, 1
      %p234 = por %p232, %p233
      %p235 = scmp.ne.s32.totalorder %s226, %s227
      %p236 = scmp.eq.s32.totalorder %s27, 0
      %p237 = por %p235, %p236
      %p238 = scmp.ne.s32.totalorder %s226, %s227
      %p239 = scmp.eq.s32.totalorder %s28, 1
      %p240 = por %p238, %p239
      %p242 = scmp.ne.s32.totalorder %s227, %s241
      %p243 = scmp.eq.s32.totalorder %s28, 0
      %p244 = por %p242, %p243
      %s246 = sadd.s32 %s245, 1
      %p249 = scmp.eq.s32.totalorder %s22, 1
      %p250 = scmp.ne.s32.totalorder %s245, %s247
      %p251 = scmp.eq.s32.totalorder %s22, 0
      %p252 = por %p250, %p251
      %p253 = scmp.ne.s32.totalorder %s245, %s247
      %p254 = scmp.eq.s32.totalorder %s27, 1
      %p255 = por %p253, %p254
      %p256 = scmp.ne.s32.totalorder %s247, %s248
      %p257 = scmp.eq.s32.totalorder %s27, 0
      %p258 = por %p256, %p257
      %p259 = scmp.ne.s32.totalorder %s247, %s248
      %p260 = scmp.eq.s32.totalorder %s28, 1
      %p261 = por %p259, %p260
      %p263 = scmp.ne.s32.totalorder %s248, %s262
      %p264 = scmp.eq.s32.totalorder %s28, 0
      %p265 = por %p263, %p264
      %s267 = sadd.s32 %s266, 1
      %p270 = scmp.eq.s32.totalorder %s22, 1
      %p271 = scmp.ne.s32.totalorder %s266, %s268
      %p272 = scmp.eq.s32.totalorder %s22, 0
      %p273 = por %p271, %p272
      %p274 = scmp.ne.s32.totalorder %s266, %s268
      %p275 = scmp.eq.s32.totalorder %s27, 1
      %p276 = por %p274, %p275
      %p277 = scmp.ne.s32.totalorder %s268, %s269
      %p278 = scmp.eq.s32.totalorder %s27, 0
      %p279 = por %p277, %p278
      %p280 = scmp.ne.s32.totalorder %s268, %s269
      %p281 = scmp.eq.s32.totalorder %s28, 1
      %p282 = por %p280, %p281
      %p284 = scmp.ne.s32.totalorder %s269, %s283
      %p285 = scmp.eq.s32.totalorder %s28, 0
      %p286 = por %p284, %p285
      %s288 = sadd.s32 %s287, 1
      %p291 = scmp.eq.s32.totalorder %s22, 1
      %p292 = scmp.ne.s32.totalorder %s287, %s289
      %p293 = scmp.eq.s32.totalorder %s22, 0
      %p294 = por %p292, %p293
      %p295 = scmp.ne.s32.totalorder %s287, %s289
      %p296 = scmp.eq.s32.totalorder %s27, 1
      %p297 = por %p295, %p296
      %p298 = scmp.ne.s32.totalorder %s289, %s290
      %p299 = scmp.eq.s32.totalorder %s27, 0
      %p300 = por %p298, %p299
      %p301 = scmp.ne.s32.totalorder %s289, %s290
      %p302 = scmp.eq.s32.totalorder %s28, 1
      %p303 = por %p301, %p302
      %p305 = scmp.ne.s32.totalorder %s290, %s304
      %p306 = scmp.eq.s32.totalorder %s28, 0
      %p307 = por %p305, %p306
      %s308 = ssub.s32 %s22, %s29
      %p309 = scmp.eq.s32.totalorder %s308, 0
      %s311 = sadd.s32 %s310, 1
      %s312 = scalar_select %p309, %s310, %s311
      %p315 = pneg %p309
      %p316 = scmp.eq.s32.totalorder %s22, 1
      %p317 = por %p315, %p316
      %p318 = scmp.ne.s32.totalorder %s310, %s313
      %p319 = scmp.eq.s32.totalorder %s22, 0
      %p320 = por %p318, %p319
      %p321 = scmp.ne.s32.totalorder %s310, %s313
      %p322 = scmp.eq.s32.totalorder %s27, 1
      %p323 = por %p321, %p322
      %p324 = scmp.ne.s32.totalorder %s313, %s314
      %p325 = scmp.eq.s32.totalorder %s27, 0
      %p326 = por %p324, %p325
      %p327 = scmp.ne.s32.totalorder %s313, %s314
      %p328 = scmp.eq.s32.totalorder %s28, 1
      %p329 = por %p327, %p328
      %p331 = scmp.ne.s32.totalorder %s314, %s330
      %p332 = scmp.eq.s32.totalorder %s28, 0
      %p333 = por %p331, %p332
      %p334 = scmp.le.s32.totalorder 1, %s22
      %p335 = scmp.lt.s32.totalorder %s22, 3
      %p336 = pnand %p334, %p335
      %p337 = pneg %p336
      // Predicated region
      $region9: #{tsception_forward.1} parent=5 // pred_check
        _
      $region10: #{tsception_forward.1} parent=5 // pred_check_branch
        %339 = sbr.rel (%p336) target = $region12
      $region11: #{tsception_forward.1} parent=5 // pred_region
        %s340 = ssub.s32 %s22, 1
        // Predicated region
        $region13: #{tsception_forward.1} parent=11 // pred_check
          %p341 = pneg %p69
        $region14: #{tsception_forward.1} parent=11 // pred_check_branch
          %343 = sbr.rel (%p341) target = $region16
        $region15: #{tsception_forward.1} parent=11 // pred_region
          _
        $region16: #{tsception_forward.1} parent=11 // pred_fallthru
          _
        // Predicated region
        $region17: #{tsception_forward.1} parent=11 // pred_check
          %p344 = pneg %p90
        $region18: #{tsception_forward.1} parent=11 // pred_check_branch
          %346 = sbr.rel (%p344) target = $region20
        $region19: #{tsception_forward.1} parent=11 // pred_region
          _
        $region20: #{tsception_forward.1} parent=11 // pred_fallthru
          _
        // Predicated region
        $region21: #{tsception_forward.1} parent=11 // pred_check
          %p347 = pneg %p111
        $region22: #{tsception_forward.1} parent=11 // pred_check_branch
          %349 = sbr.rel (%p347) target = $region24
        $region23: #{tsception_forward.1} parent=11 // pred_region
          _
        $region24: #{tsception_forward.1} parent=11 // pred_fallthru
          _
        // Predicated region
        $region25: #{tsception_forward.1} parent=11 // pred_check
          %p350 = pneg %p132
        $region26: #{tsception_forward.1} parent=11 // pred_check_branch
          %352 = sbr.rel (%p350) target = $region28
        $region27: #{tsception_forward.1} parent=11 // pred_region
          _
        $region28: #{tsception_forward.1} parent=11 // pred_fallthru
          _
        // Predicated region
        $region29: #{tsception_forward.1} parent=11 // pred_check
          %p353 = pneg %p153
        $region30: #{tsception_forward.1} parent=11 // pred_check_branch
          %355 = sbr.rel (%p353) target = $region32
        $region31: #{tsception_forward.1} parent=11 // pred_region
          _
        $region32: #{tsception_forward.1} parent=11 // pred_fallthru
          _
        // Predicated region
        $region33: #{tsception_forward.1} parent=11 // pred_check
          %p356 = pneg %p174
        $region34: #{tsception_forward.1} parent=11 // pred_check_branch
          %358 = sbr.rel (%p356) target = $region36
        $region35: #{tsception_forward.1} parent=11 // pred_region
          _
        $region36: #{tsception_forward.1} parent=11 // pred_fallthru
          _
        // Predicated region
        $region37: #{tsception_forward.1} parent=11 // pred_check
          %p359 = pneg %p195
        $region38: #{tsception_forward.1} parent=11 // pred_check_branch
          %361 = sbr.rel (%p359) target = $region40
        $region39: #{tsception_forward.1} parent=11 // pred_region
          _
        $region40: #{tsception_forward.1} parent=11 // pred_fallthru
          _
        // Predicated region
        $region41: #{tsception_forward.1} parent=11 // pred_check
          %p362 = pneg %p216
        $region42: #{tsception_forward.1} parent=11 // pred_check_branch
          %364 = sbr.rel (%p362) target = $region44
        $region43: #{tsception_forward.1} parent=11 // pred_region
          _
        $region44: #{tsception_forward.1} parent=11 // pred_fallthru
          _
        // Predicated region
        $region45: #{tsception_forward.1} parent=11 // pred_check
          %p365 = pneg %p237
        $region46: #{tsception_forward.1} parent=11 // pred_check_branch
          %367 = sbr.rel (%p365) target = $region48
        $region47: #{tsception_forward.1} parent=11 // pred_region
          _
        $region48: #{tsception_forward.1} parent=11 // pred_fallthru
          _
        // Predicated region
        $region49: #{tsception_forward.1} parent=11 // pred_check
          %p368 = pneg %p258
        $region50: #{tsception_forward.1} parent=11 // pred_check_branch
          %370 = sbr.rel (%p368) target = $region52
        $region51: #{tsception_forward.1} parent=11 // pred_region
          _
        $region52: #{tsception_forward.1} parent=11 // pred_fallthru
          _
        // Predicated region
        $region53: #{tsception_forward.1} parent=11 // pred_check
          %p371 = pneg %p279
        $region54: #{tsception_forward.1} parent=11 // pred_check_branch
          %373 = sbr.rel (%p371) target = $region56
        $region55: #{tsception_forward.1} parent=11 // pred_region
          _
        $region56: #{tsception_forward.1} parent=11 // pred_fallthru
          _
        // Predicated region
        $region57: #{tsception_forward.1} parent=11 // pred_check
          %p374 = pneg %p300
        $region58: #{tsception_forward.1} parent=11 // pred_check_branch
          %376 = sbr.rel (%p374) target = $region60
        $region59: #{tsception_forward.1} parent=11 // pred_region
          _
        $region60: #{tsception_forward.1} parent=11 // pred_fallthru
          _
      $region12: #{tsception_forward.1} parent=5 // pred_fallthru
        _
      %p377 = scmp.lt.s32.totalorder %s22, 2
      // Predicated region
      $region61: #{tsception_forward.1} parent=5 // pred_check
        %p378 = pneg %p377
      $region62: #{tsception_forward.1} parent=5 // pred_check_branch
        %380 = sbr.rel (%p378) target = $region64
      $region63: #{tsception_forward.1} parent=5 // pred_region
        // Predicated region
        $region65: #{tsception_forward.1} parent=63 // pred_check
          %p381 = pneg %p42
        $region66: #{tsception_forward.1} parent=63 // pred_check_branch
          %383 = sbr.rel (%p381) target = $region68
        $region67: #{tsception_forward.1} parent=63 // pred_region
          %p384 = scmp.lt.s32.totalorder %s22, 1
          %s385 = scalar_select %p384, %s22, 1
          %s386 = smul.addr %s385, 14
          %s387 = smul.addr %s386, 8
          %s388 = scalar_lea.vmem %s0, %s387
        $region68: #{tsception_forward.1} parent=63 // pred_fallthru
          _
      $region64: #{tsception_forward.1} parent=5 // pred_fallthru
        _
      %p389 = scmp.le.s32.totalorder 1, %s22
      %p390 = scmp.lt.s32.totalorder %s22, 3
      %p391 = pnand %p389, %p390
      %p392 = pneg %p391
      // Predicated region
      $region69: #{tsception_forward.1} parent=5 // pred_check
        _
      $region70: #{tsception_forward.1} parent=5 // pred_check_branch
        %394 = sbr.rel (%p391) target = $region72
      $region71: #{tsception_forward.1} parent=5 // pred_region
        %s395 = ssub.s32 %s22, 1
        %p396 = scmp.lt.s32.totalorder %s27, 1
        %s397 = scalar_select %p396, %s27, 1
        %s398 = smul.addr %s397, 14
        %s399 = smul.addr %s398, 8
        %s400 = scalar_lea.vmem %s0, %s399
        %p401 = pneg %p48
        %p402 = pneg %p45
        %p403 = pneg %p69
        %p404 = pneg %p66
        %p405 = pneg %p90
        %p406 = pneg %p87
        %p407 = pneg %p111
        %p408 = pneg %p108
        %p409 = pneg %p132
        %p410 = pneg %p129
        %p411 = pneg %p153
        %p412 = pneg %p150
        %p413 = pneg %p174
        %p414 = pneg %p171
        %p415 = pneg %p195
        %p416 = pneg %p192
        %p417 = pneg %p216
        %p418 = pneg %p213
        %p419 = pneg %p237
        %p420 = pneg %p234
        %p421 = pneg %p258
        %p422 = pneg %p255
        %p423 = pneg %p279
        %p424 = pneg %p276
        %p425 = pneg %p300
        %p426 = pneg %p297
        %p427 = pneg %p326
        %p428 = pneg %p323
        %s429 = sand.u32 %s313, 1
        %s430 = scalar_lea.sflag [#allocation3], %s429
        %s431 = sand.u32 %s313, 1
        %s432 = scalar_lea.vmem [#allocation2], %s431
        %p433 = scmp.lt.s32.totalorder %s27, 1
        %s434 = scalar_select %p433, %s27, 1
        %s435 = smul.addr %s434, 14
        %s436 = smul.addr %s435, 8
        %s437 = scalar_lea.vmem %s0, %s436
        %v438 = vld [vmem:[%s437] sm:$0xff]
        %v439 = vld [vmem:[%s437 + $0x8] sm:$0xff]
        %v440 = vld [vmem:[%s437 + $0x10] sm:$0xff]
        %v441 = vld [vmem:[%s437 + $0x18] sm:$0xff]
        %v442 = vld [vmem:[%s437 + $0x20] sm:$0xff]
        %v443 = vld [vmem:[%s437 + $0x28] sm:$0xff]
        %v444 = vld [vmem:[%s437 + $0x30] sm:$0xff]
        %v445 = vld [vmem:[%s437 + $0x38] sm:$0xff]
        %v446 = vld [vmem:[%s437 + $0x40] sm:$0xff]
        %v447 = vld [vmem:[%s437 + $0x48] sm:$0xff]
        %v448 = vld [vmem:[%s437 + $0x50] sm:$0xff]
        %v449 = vld [vmem:[%s437 + $0x58] sm:$0xff]
        %v450 = vld [vmem:[%s437 + $0x60] sm:$0xff]
        %v451 = vld [vmem:[%s437 + $0x68] sm:$0xff]
        %v452 = vld [vmem:[%s1] sm:$0xff]
        %v453 = vld [vmem:[%s1 + $0x8] sm:$0xff]
        %v454 = vld [vmem:[%s1 + $0x10] sm:$0xff]
        %v455 = vld [vmem:[%s1 + $0x18] sm:$0xff]
        %v456 = vld [vmem:[%s1 + $0x20] sm:$0xff]
        %v457 = vld [vmem:[%s1 + $0x28] sm:$0xff]
        %v458 = vld [vmem:[%s1 + $0x30] sm:$0xff]
        %v459 = vld [vmem:[%s1 + $0x38] sm:$0xff]
        %v460 = vld [vmem:[%s1 + $0x40] sm:$0xff]
        %v461 = vld [vmem:[%s1 + $0x48] sm:$0xff]
        %v462 = vld [vmem:[%s1 + $0x50] sm:$0xff]
        %v463 = vld [vmem:[%s1 + $0x58] sm:$0xff]
        %v464 = vld [vmem:[%s1 + $0x60] sm:$0xff]
        %v465 = vld [vmem:[%s1 + $0x68] sm:$0xff]
        %v466 = vld [vmem:[%s1 + $0x70] sm:$0xff]
        %v467 = vld [vmem:[%s2] sm:$0xff]
        %v468 = vld [vmem:[%s2 + $0x8] sm:$0xff]
        %v469 = vld [vmem:[%s2 + $0x10] sm:$0xff]
        %v470 = vld [vmem:[%s2 + $0x18] sm:$0xff]
        %v471 = vld [vmem:[%s2 + $0x20] sm:$0xff]
        %v472 = vld [vmem:[%s2 + $0x28] sm:$0xff]
        %v473 = vld [vmem:[%s2 + $0x30] sm:$0xff]
        %v474 = vld [vmem:[%s2 + $0x38] sm:$0xff]
        %v475 = vld [vmem:[%s2 + $0x40] sm:$0xff]
        %v476 = vld [vmem:[%s2 + $0x48] sm:$0xff]
        %v477 = vld [vmem:[%s2 + $0x50] sm:$0xff]
        %v478 = vld [vmem:[%s2 + $0x58] sm:$0xff]
        %v479 = vld [vmem:[%s2 + $0x60] sm:$0xff]
        %v480 = vld [vmem:[%s2 + $0x68] sm:$0xff]
        %v481 = vld [vmem:[%s2 + $0x70] sm:$0xff]
        %483 = vset.pattern.permute.xlu0 0
        %484 = vperm.xlu0 %483, %v467
        %v485 = vpop.permute.xlu0 %484
        %488 = vset.pattern.permute.xlu0 0
        %489 = vperm.xlu0 %488, %v468
        %v490 = vpop.permute.xlu0 %489
        %493 = vset.pattern.permute.xlu0 0
        %494 = vperm.xlu0 %493, %v469
        %v495 = vpop.permute.xlu0 %494
        %498 = vset.pattern.permute.xlu0 0
        %499 = vperm.xlu0 %498, %v470
        %v500 = vpop.permute.xlu0 %499
        %503 = vset.pattern.permute.xlu0 0
        %504 = vperm.xlu0 %503, %v471
        %v505 = vpop.permute.xlu0 %504
        %508 = vset.pattern.permute.xlu0 0
        %509 = vperm.xlu0 %508, %v472
        %v510 = vpop.permute.xlu0 %509
        %513 = vset.pattern.permute.xlu0 0
        %514 = vperm.xlu0 %513, %v473
        %v515 = vpop.permute.xlu0 %514
        %518 = vset.pattern.permute.xlu0 0
        %519 = vperm.xlu0 %518, %v474
        %v520 = vpop.permute.xlu0 %519
        %523 = vset.pattern.permute.xlu0 0
        %524 = vperm.xlu0 %523, %v475
        %v525 = vpop.permute.xlu0 %524
        %528 = vset.pattern.permute.xlu0 0
        %529 = vperm.xlu0 %528, %v476
        %v530 = vpop.permute.xlu0 %529
        %533 = vset.pattern.permute.xlu0 0
        %534 = vperm.xlu0 %533, %v477
        %v535 = vpop.permute.xlu0 %534
        %538 = vset.pattern.permute.xlu0 0
        %539 = vperm.xlu0 %538, %v478
        %v540 = vpop.permute.xlu0 %539
        %543 = vset.pattern.permute.xlu0 0
        %544 = vperm.xlu0 %543, %v479
        %v545 = vpop.permute.xlu0 %544
        %548 = vset.pattern.permute.xlu0 0
        %549 = vperm.xlu0 %548, %v480
        %v550 = vpop.permute.xlu0 %549
        %553 = vset.pattern.permute.xlu0 0
        %554 = vperm.xlu0 %553, %v481
        %v555 = vpop.permute.xlu0 %554
        %vm557 = vcmask 916480
        %v559 = vsel %vm557, %v452, 0
        %v562 = vsel %vm557, %v453, 0
        %v565 = vsel %vm557, %v454, 0
        %v568 = vsel %vm557, %v455, 0
        %v571 = vsel %vm557, %v456, 0
        %v574 = vsel %vm557, %v457, 0
        %v577 = vsel %vm557, %v458, 0
        %v580 = vsel %vm557, %v459, 0
        %v583 = vsel %vm557, %v460, 0
        %v586 = vsel %vm557, %v461, 0
        %v589 = vsel %vm557, %v462, 0
        %v592 = vsel %vm557, %v463, 0
        %v595 = vsel %vm557, %v464, 0
        %v598 = vsel %vm557, %v465, 0
        %v601 = vsel %vm557, %v466, 0
        %603 = vmatprep.subr.mxu0 0.0
        %604 = vmatpush1.msra.mxu0 %v438
        %605 = vmatprep.subr.mxu0 0.0
        %606 = vmatpush1.msra.mxu0 %v439
        %607 = vmatprep.subr.mxu0 0.0
        %608 = vmatpush1.msra.mxu0 %v440
        %609 = vmatprep.subr.mxu0 0.0
        %610 = vmatpush1.msra.mxu0 %v441
        %611 = vmatprep.subr.mxu0 0.0
        %612 = vmatpush1.msra.mxu0 %v442
        %613 = vmatprep.subr.mxu0 0.0
        %614 = vmatpush1.msra.mxu0 %v443
        %615 = vmatprep.subr.mxu0 0.0
        %616 = vmatpush1.msra.mxu0 %v444
        %617 = vmatprep.subr.mxu0 0.0
        %618 = vmatpush1.msra.mxu0 %v445
        %619 = vmatprep.subr.mxu0 0.0
        %620 = vmatpush1.msra.mxu0 %v446
        %621 = vmatprep.subr.mxu0 0.0
        %622 = vmatpush1.msra.mxu0 %v447
        %623 = vmatprep.subr.mxu0 0.0
        %624 = vmatpush1.msra.mxu0 %v448
        %625 = vmatprep.subr.mxu0 0.0
        %626 = vmatpush1.msra.mxu0 %v449
        %627 = vmatprep.subr.mxu0 0.0
        %628 = vmatpush1.msra.mxu0 %v450
        %629 = vmatprep.subr.mxu0 0.0
        %630 = vmatpush1.msra.mxu0 %v451
        %631 = vmatprep.subr.mxu0 0.0
        %632 = vmatpush1.msra.mxu0 0.0
        %633 = vmatprep.subr.mxu0 0.0
        %634 = vmatpush1.msra.mxu0 0.0
        %635 = vmatprep.subr.mxu0 0.0
        %636 = vmatpush1.msra.mxu0 0.0
        %637 = vmatprep.subr.mxu0 0.0
        %638 = vmatpush1.msra.mxu0 0.0
        %639 = vmatprep.subr.mxu0 0.0
        %640 = vmatpush1.msra.mxu0 0.0
        %641 = vmatprep.subr.mxu0 0.0
        %642 = vmatpush1.msra.mxu0 0.0
        %643 = vmatprep.subr.mxu0 0.0
        %644 = vmatpush1.msra.mxu0 0.0
        %645 = vmatprep.subr.mxu0 0.0
        %646 = vmatpush1.msra.mxu0 0.0
        %647 = vmatprep.subr.mxu0 0.0
        %648 = vmatpush1.msra.mxu0 0.0
        %649 = vmatprep.subr.mxu0 0.0
        %650 = vmatpush1.msra.mxu0 0.0
        %651 = vmatprep.subr.mxu0 0.0
        %652 = vmatpush1.msra.mxu0 0.0
        %653 = vmatprep.subr.mxu0 0.0
        %654 = vmatpush1.msra.mxu0 0.0
        %655 = vmatprep.subr.mxu0 0.0
        %656 = vmatpush1.msra.mxu0 0.0
        %657 = vmatprep.subr.mxu0 0.0
        %658 = vmatpush1.msra.mxu0 0.0
        %659 = vmatprep.subr.mxu0 0.0
        %660 = vmatpush1.msra.mxu0 0.0
        %661 = vmatprep.subr.mxu0 0.0
        %662 = vmatpush1.msra.mxu0 0.0
        %663 = vmatprep.subr.mxu0 0.0
        %664 = vmatpush1.msra.mxu0 0.0
        %665 = vmatprep.subr.mxu0 0.0
        %666 = vmatpush1.msra.mxu0 0.0
        %667 = vmatprep.mubr.f32.mxu0 0.0
        %668 = vmatmul.mubr.f32.gmra.mrb[0].mxu0 %v559
        %v669 = vpop.f32.mrb[0].mxu0
        %v670 = vadd.f32 %v485, %v669
        %v671 = vpop.f32.mrb[0].mxu0
        %672 = vmatprep.mubr.f32.mxu0 0.0
        %673 = vmatmul.mubr.f32.gmra.mrb[0].mxu0 %v562
        %v674 = vpop.f32.mrb[0].mxu0
        %v675 = vadd.f32 %v490, %v674
        %v676 = vpop.f32.mrb[0].mxu0
        %677 = vmatprep.mubr.f32.mxu0 0.0
        %678 = vmatmul.mubr.f32.gmra.mrb[0].mxu0 %v565
        %v679 = vpop.f32.mrb[0].mxu0
        %v680 = vadd.f32 %v495, %v679
        %v681 = vpop.f32.mrb[0].mxu0
        %682 = vmatprep.mubr.f32.mxu0 0.0
        %683 = vmatmul.mubr.f32.gmra.mrb[0].mxu0 %v568
        %v684 = vpop.f32.mrb[0].mxu0
        %v685 = vadd.f32 %v500, %v684
        %v686 = vpop.f32.mrb[0].mxu0
        %687 = vmatprep.mubr.f32.mxu0 0.0
        %688 = vmatmul.mubr.f32.gmra.mrb[0].mxu0 %v571
        %v689 = vpop.f32.mrb[0].mxu0
        %v690 = vadd.f32 %v505, %v689
        %v691 = vpop.f32.mrb[0].mxu0
        %692 = vmatprep.mubr.f32.mxu0 0.0
        %693 = vmatmul.mubr.f32.gmra.mrb[0].mxu0 %v574
        %v694 = vpop.f32.mrb[0].mxu0
        %v695 = vadd.f32 %v510, %v694
        %v696 = vpop.f32.mrb[0].mxu0
        %697 = vmatprep.mubr.f32.mxu0 0.0
        %698 = vmatmul.mubr.f32.gmra.mrb[0].mxu0 %v577
        %v699 = vpop.f32.mrb[0].mxu0
        %v700 = vadd.f32 %v515, %v699
        %v701 = vpop.f32.mrb[0].mxu0
        %702 = vmatprep.mubr.f32.mxu0 0.0
        %703 = vmatmul.mubr.f32.gmra.mrb[0].mxu0 %v580
        %v704 = vpop.f32.mrb[0].mxu0
        %v705 = vadd.f32 %v520, %v704
        %v706 = vpop.f32.mrb[0].mxu0
        %707 = vmatprep.mubr.f32.mxu0 0.0
        %708 = vmatmul.mubr.f32.gmra.mrb[0].mxu0 %v583
        %v709 = vpop.f32.mrb[0].mxu0
        %v710 = vadd.f32 %v525, %v709
        %v711 = vpop.f32.mrb[0].mxu0
        %712 = vmatprep.mubr.f32.mxu0 0.0
        %713 = vmatmul.mubr.f32.gmra.mrb[0].mxu0 %v586
        %v714 = vpop.f32.mrb[0].mxu0
        %v715 = vadd.f32 %v530, %v714
        %v716 = vpop.f32.mrb[0].mxu0
        %717 = vmatprep.mubr.f32.mxu0 0.0
        %718 = vmatmul.mubr.f32.gmra.mrb[0].mxu0 %v589
        %v719 = vpop.f32.mrb[0].mxu0
        %v720 = vadd.f32 %v535, %v719
        %v721 = vpop.f32.mrb[0].mxu0
        %722 = vmatprep.mubr.f32.mxu0 0.0
        %723 = vmatmul.mubr.f32.gmra.mrb[0].mxu0 %v592
        %v724 = vpop.f32.mrb[0].mxu0
        %v725 = vadd.f32 %v540, %v724
        %v726 = vpop.f32.mrb[0].mxu0
        %727 = vmatprep.mubr.f32.mxu0 0.0
        %728 = vmatmul.mubr.f32.gmra.mrb[0].mxu0 %v595
        %v729 = vpop.f32.mrb[0].mxu0
        %v730 = vadd.f32 %v545, %v729
        %v731 = vpop.f32.mrb[0].mxu0
        %732 = vmatprep.mubr.f32.mxu0 0.0
        %733 = vmatmul.mubr.f32.gmra.mrb[0].mxu0 %v598
        %v734 = vpop.f32.mrb[0].mxu0
        %v735 = vadd.f32 %v550, %v734
        %v736 = vpop.f32.mrb[0].mxu0
        %737 = vmatprep.mubr.f32.mxu0 0.0
        %738 = vmatmul.mubr.f32.gmra.mrb[0].mxu0 %v601
        %v739 = vpop.f32.mrb[0].mxu0
        %v740 = vadd.f32 %v555, %v739
        %v741 = vpop.f32.mrb[0].mxu0
        %742 = vdwg.mxu0
        %vm743 = vcmp.ge.f32.partialorder %v670, 0.0
        %vm744 = vcmp.ge.f32.partialorder %v675, 0.0
        %vm745 = vcmp.ge.f32.partialorder %v680, 0.0
        %vm746 = vcmp.ge.f32.partialorder %v685, 0.0
        %vm747 = vcmp.ge.f32.partialorder %v690, 0.0
        %vm748 = vcmp.ge.f32.partialorder %v695, 0.0
        %vm749 = vcmp.ge.f32.partialorder %v700, 0.0
        %vm750 = vcmp.ge.f32.partialorder %v705, 0.0
        %vm751 = vcmp.ge.f32.partialorder %v710, 0.0
        %vm752 = vcmp.ge.f32.partialorder %v715, 0.0
        %vm753 = vcmp.ge.f32.partialorder %v720, 0.0
        %vm754 = vcmp.ge.f32.partialorder %v725, 0.0
        %vm755 = vcmp.ge.f32.partialorder %v730, 0.0
        %vm756 = vcmp.ge.f32.partialorder %v735, 0.0
        %vm757 = vcmp.ge.f32.partialorder %v740, 0.0
        %v758 = vmul.f32 %v670, 0.01
        %v759 = vmul.f32 %v675, 0.01
        %v760 = vmul.f32 %v680, 0.01
        %v761 = vmul.f32 %v685, 0.01
        %v762 = vmul.f32 %v690, 0.01
        %v763 = vmul.f32 %v695, 0.01
        %v764 = vmul.f32 %v700, 0.01
        %v765 = vmul.f32 %v705, 0.01
        %v766 = vmul.f32 %v710, 0.01
        %v767 = vmul.f32 %v715, 0.01
        %v768 = vmul.f32 %v720, 0.01
        %v769 = vmul.f32 %v725, 0.01
        %v770 = vmul.f32 %v730, 0.01
        %v771 = vmul.f32 %v735, 0.01
        %v772 = vmul.f32 %v740, 0.01
        %v773 = vsel %vm743, %v670, %v758
        %v774 = vsel %vm744, %v675, %v759
        %v775 = vsel %vm745, %v680, %v760
        %v776 = vsel %vm746, %v685, %v761
        %v777 = vsel %vm747, %v690, %v762
        %v778 = vsel %vm748, %v695, %v763
        %v779 = vsel %vm749, %v700, %v764
        %v780 = vsel %vm750, %v705, %v765
        %v781 = vsel %vm751, %v710, %v766
        %v782 = vsel %vm752, %v715, %v767
        %v783 = vsel %vm753, %v720, %v768
        %v784 = vsel %vm754, %v725, %v769
        %v785 = vsel %vm755, %v730, %v770
        %v786 = vsel %vm756, %v735, %v771
        %v787 = vsel %vm757, %v740, %v772
        %v788 = vld [vmem:[%s3] sm:$0xff]
        %v789 = vld [vmem:[%s3 + $0x8] sm:$0xff]
        %v790 = vld [vmem:[%s3 + $0x10] sm:$0xff]
        %v791 = vld [vmem:[%s3 + $0x18] sm:$0xff]
        %v792 = vld [vmem:[%s3 + $0x20] sm:$0xff]
        %v793 = vld [vmem:[%s3 + $0x28] sm:$0xff]
        %v794 = vld [vmem:[%s3 + $0x30] sm:$0xff]
        %v795 = vld [vmem:[%s3 + $0x38] sm:$0xff]
        %v796 = vld [vmem:[%s3 + $0x40] sm:$0xff]
        %v797 = vld [vmem:[%s3 + $0x48] sm:$0xff]
        %v798 = vld [vmem:[%s3 + $0x50] sm:$0xff]
        %v799 = vld [vmem:[%s3 + $0x58] sm:$0xff]
        %v800 = vld [vmem:[%s3 + $0x60] sm:$0xff]
        %v801 = vld [vmem:[%s3 + $0x68] sm:$0xff]
        %v802 = vld [vmem:[%s3 + $0x70] sm:$0xff]
        %v803 = vld [vmem:[%s3 + $0x78] sm:$0xff]
        %804 = vmatprep.subr.mxu0 0.0
        %805 = vmatpush1.msra.mxu0 %v788
        %806 = vmatprep.subr.mxu0 0.0
        %807 = vmatpush1.msra.mxu0 %v789
        %808 = vmatprep.subr.mxu0 0.0
        %809 = vmatpush1.msra.mxu0 %v790
        %810 = vmatprep.subr.mxu0 0.0
        %811 = vmatpush1.msra.mxu0 %v791
        %812 = vmatprep.subr.mxu0 0.0
        %813 = vmatpush1.msra.mxu0 %v792
        %814 = vmatprep.subr.mxu0 0.0
        %815 = vmatpush1.msra.mxu0 %v793
        %816 = vmatprep.subr.mxu0 0.0
        %817 = vmatpush1.msra.mxu0 %v794
        %818 = vmatprep.subr.mxu0 0.0
        %819 = vmatpush1.msra.mxu0 %v795
        %820 = vmatprep.subr.mxu0 0.0
        %821 = vmatpush1.msra.mxu0 %v796
        %822 = vmatprep.subr.mxu0 0.0
        %823 = vmatpush1.msra.mxu0 %v797
        %824 = vmatprep.subr.mxu0 0.0
        %825 = vmatpush1.msra.mxu0 %v798
        %826 = vmatprep.subr.mxu0 0.0
        %827 = vmatpush1.msra.mxu0 %v799
        %828 = vmatprep.subr.mxu0 0.0
        %829 = vmatpush1.msra.mxu0 %v800
        %830 = vmatprep.subr.mxu0 0.0
        %831 = vmatpush1.msra.mxu0 %v801
        %832 = vmatprep.subr.mxu0 0.0
        %833 = vmatpush1.msra.mxu0 %v802
        %834 = vmatprep.subr.mxu0 0.0
        %835 = vmatpush1.msra.mxu0 %v803
        %836 = vmatprep.subr.mxu0 0.0
        %837 = vmatpush1.msra.mxu0 0.0
        %838 = vmatprep.subr.mxu0 0.0
        %839 = vmatpush1.msra.mxu0 0.0
        %840 = vmatprep.subr.mxu0 0.0
        %841 = vmatpush1.msra.mxu0 0.0
        %842 = vmatprep.subr.mxu0 0.0
        %843 = vmatpush1.msra.mxu0 0.0
        %844 = vmatprep.subr.mxu0 0.0
        %845 = vmatpush1.msra.mxu0 0.0
        %846 = vmatprep.subr.mxu0 0.0
        %847 = vmatpush1.msra.mxu0 0.0
        %848 = vmatprep.subr.mxu0 0.0
        %849 = vmatpush1.msra.mxu0 0.0
        %850 = vmatprep.subr.mxu0 0.0
        %851 = vmatpush1.msra.mxu0 0.0
        %852 = vmatprep.subr.mxu0 0.0
        %853 = vmatpush1.msra.mxu0 0.0
        %854 = vmatprep.subr.mxu0 0.0
        %855 = vmatpush1.msra.mxu0 0.0
        %856 = vmatprep.subr.mxu0 0.0
        %857 = vmatpush1.msra.mxu0 0.0
        %858 = vmatprep.subr.mxu0 0.0
        %859 = vmatpush1.msra.mxu0 0.0
        %860 = vmatprep.subr.mxu0 0.0
        %861 = vmatpush1.msra.mxu0 0.0
        %862 = vmatprep.subr.mxu0 0.0
        %863 = vmatpush1.msra.mxu0 0.0
        %864 = vmatprep.subr.mxu0 0.0
        %865 = vmatpush1.msra.mxu0 0.0
        %866 = vmatprep.subr.mxu0 0.0
        %867 = vmatpush1.msra.mxu0 0.0
        %868 = vmatprep.mubr.f32.mxu0 0.0
        %869 = vmatmul.mubr.f32.gmra.mrb[0].mxu0 %v773
        %v870 = vpop.f32.mrb[0].mxu0
        %v871 = vadd.f32 0.0, %v870
        %v872 = vpop.f32.mrb[0].mxu0
        %873 = vmatprep.mubr.f32.mxu0 0.0
        %874 = vmatmul.mubr.f32.gmra.mrb[0].mxu0 %v774
        %v875 = vpop.f32.mrb[0].mxu0
        %v876 = vadd.f32 0.0, %v875
        %v877 = vpop.f32.mrb[0].mxu0
        %878 = vmatprep.mubr.f32.mxu0 0.0
        %879 = vmatmul.mubr.f32.gmra.mrb[0].mxu0 %v775
        %v880 = vpop.f32.mrb[0].mxu0
        %v881 = vadd.f32 0.0, %v880
        %v882 = vpop.f32.mrb[0].mxu0
        %883 = vmatprep.mubr.f32.mxu0 0.0
        %884 = vmatmul.mubr.f32.gmra.mrb[0].mxu0 %v776
        %v885 = vpop.f32.mrb[0].mxu0
        %v886 = vadd.f32 0.0, %v885
        %v887 = vpop.f32.mrb[0].mxu0
        %888 = vmatprep.mubr.f32.mxu0 0.0
        %889 = vmatmul.mubr.f32.gmra.mrb[0].mxu0 %v777
        %v890 = vpop.f32.mrb[0].mxu0
        %v891 = vadd.f32 0.0, %v890
        %v892 = vpop.f32.mrb[0].mxu0
        %893 = vdwg.mxu0
        %v894 = vld [vmem:[%s4] sm:$0xff]
        %v895 = vld [vmem:[%s4 + $0x8] sm:$0xff]
        %v896 = vld [vmem:[%s4 + $0x10] sm:$0xff]
        %v897 = vld [vmem:[%s4 + $0x18] sm:$0xff]
        %v898 = vld [vmem:[%s4 + $0x20] sm:$0xff]
        %v899 = vld [vmem:[%s4 + $0x28] sm:$0xff]
        %v900 = vld [vmem:[%s4 + $0x30] sm:$0xff]
        %v901 = vld [vmem:[%s4 + $0x38] sm:$0xff]
        %v902 = vld [vmem:[%s4 + $0x40] sm:$0xff]
        %v903 = vld [vmem:[%s4 + $0x48] sm:$0xff]
        %v904 = vld [vmem:[%s4 + $0x50] sm:$0xff]
        %v905 = vld [vmem:[%s4 + $0x58] sm:$0xff]
        %v906 = vld [vmem:[%s4 + $0x60] sm:$0xff]
        %v907 = vld [vmem:[%s4 + $0x68] sm:$0xff]
        %v908 = vld [vmem:[%s4 + $0x70] sm:$0xff]
        %v909 = vld [vmem:[%s4 + $0x78] sm:$0xff]
        %910 = vmatprep.subr.mxu0 0.0
        %911 = vmatpush1.msra.mxu0 %v894
        %912 = vmatprep.subr.mxu0 0.0
        %913 = vmatpush1.msra.mxu0 %v895
        %914 = vmatprep.subr.mxu0 0.0
        %915 = vmatpush1.msra.mxu0 %v896
        %916 = vmatprep.subr.mxu0 0.0
        %917 = vmatpush1.msra.mxu0 %v897
        %918 = vmatprep.subr.mxu0 0.0
        %919 = vmatpush1.msra.mxu0 %v898
        %920 = vmatprep.subr.mxu0 0.0
        %921 = vmatpush1.msra.mxu0 %v899
        %922 = vmatprep.subr.mxu0 0.0
        %923 = vmatpush1.msra.mxu0 %v900
        %924 = vmatprep.subr.mxu0 0.0
        %925 = vmatpush1.msra.mxu0 %v901
        %926 = vmatprep.subr.mxu0 0.0
        %927 = vmatpush1.msra.mxu0 %v902
        %928 = vmatprep.subr.mxu0 0.0
        %929 = vmatpush1.msra.mxu0 %v903
        %930 = vmatprep.subr.mxu0 0.0
        %931 = vmatpush1.msra.mxu0 %v904
        %932 = vmatprep.subr.mxu0 0.0
        %933 = vmatpush1.msra.mxu0 %v905
        %934 = vmatprep.subr.mxu0 0.0
        %935 = vmatpush1.msra.mxu0 %v906
        %936 = vmatprep.subr.mxu0 0.0
        %937 = vmatpush1.msra.mxu0 %v907
        %938 = vmatprep.subr.mxu0 0.0
        %939 = vmatpush1.msra.mxu0 %v908
        %940 = vmatprep.subr.mxu0 0.0
        %941 = vmatpush1.msra.mxu0 %v909
        %942 = vmatprep.subr.mxu0 0.0
        %943 = vmatpush1.msra.mxu0 0.0
        %944 = vmatprep.subr.mxu0 0.0
        %945 = vmatpush1.msra.mxu0 0.0
        %946 = vmatprep.subr.mxu0 0.0
        %947 = vmatpush1.msra.mxu0 0.0
        %948 = vmatprep.subr.mxu0 0.0
        %949 = vmatpush1.msra.mxu0 0.0
        %950 = vmatprep.subr.mxu0 0.0
        %951 = vmatpush1.msra.mxu0 0.0
        %952 = vmatprep.subr.mxu0 0.0
        %953 = vmatpush1.msra.mxu0 0.0
        %954 = vmatprep.subr.mxu0 0.0
        %955 = vmatpush1.msra.mxu0 0.0
        %956 = vmatprep.subr.mxu0 0.0
        %957 = vmatpush1.msra.mxu0 0.0
        %958 = vmatprep.subr.mxu0 0.0
        %959 = vmatpush1.msra.mxu0 0.0
        %960 = vmatprep.subr.mxu0 0.0
        %961 = vmatpush1.msra.mxu0 0.0
        %962 = vmatprep.subr.mxu0 0.0
        %963 = vmatpush1.msra.mxu0 0.0
        %964 = vmatprep.subr.mxu0 0.0
        %965 = vmatpush1.msra.mxu0 0.0
        %966 = vmatprep.subr.mxu0 0.0
        %967 = vmatpush1.msra.mxu0 0.0
        %968 = vmatprep.subr.mxu0 0.0
        %969 = vmatpush1.msra.mxu0 0.0
        %970 = vmatprep.subr.mxu0 0.0
        %971 = vmatpush1.msra.mxu0 0.0
        %972 = vmatprep.subr.mxu0 0.0
        %973 = vmatpush1.msra.mxu0 0.0
        %974 = vmatprep.mubr.f32.mxu0 0.0
        %975 = vmatmul.mubr.f32.gmra.mrb[0].mxu0 %v778
        %v976 = vpop.f32.mrb[0].mxu0
        %v977 = vadd.f32 0.0, %v976
        %v978 = vpop.f32.mrb[0].mxu0
        %979 = vmatprep.mubr.f32.mxu0 0.0
        %980 = vmatmul.mubr.f32.gmra.mrb[0].mxu0 %v779
        %v981 = vpop.f32.mrb[0].mxu0
        %v982 = vadd.f32 0.0, %v981
        %v983 = vpop.f32.mrb[0].mxu0
        %984 = vmatprep.mubr.f32.mxu0 0.0
        %985 = vmatmul.mubr.f32.gmra.mrb[0].mxu0 %v780
        %v986 = vpop.f32.mrb[0].mxu0
        %v987 = vadd.f32 0.0, %v986
        %v988 = vpop.f32.mrb[0].mxu0
        %989 = vmatprep.mubr.f32.mxu0 0.0
        %990 = vmatmul.mubr.f32.gmra.mrb[0].mxu0 %v781
        %v991 = vpop.f32.mrb[0].mxu0
        %v992 = vadd.f32 0.0, %v991
        %v993 = vpop.f32.mrb[0].mxu0
        %994 = vmatprep.mubr.f32.mxu0 0.0
        %995 = vmatmul.mubr.f32.gmra.mrb[0].mxu0 %v782
        %v996 = vpop.f32.mrb[0].mxu0
        %v997 = vadd.f32 0.0, %v996
        %v998 = vpop.f32.mrb[0].mxu0
        %999 = vdwg.mxu0
        %v1000 = vld [vmem:[%s5] sm:$0xff]
        %v1001 = vld [vmem:[%s5 + $0x8] sm:$0xff]
        %v1002 = vld [vmem:[%s5 + $0x10] sm:$0xff]
        %v1003 = vld [vmem:[%s5 + $0x18] sm:$0xff]
        %v1004 = vld [vmem:[%s5 + $0x20] sm:$0xff]
        %v1005 = vld [vmem:[%s5 + $0x28] sm:$0xff]
        %v1006 = vld [vmem:[%s5 + $0x30] sm:$0xff]
        %v1007 = vld [vmem:[%s5 + $0x38] sm:$0xff]
        %v1008 = vld [vmem:[%s5 + $0x40] sm:$0xff]
        %v1009 = vld [vmem:[%s5 + $0x48] sm:$0xff]
        %v1010 = vld [vmem:[%s5 + $0x50] sm:$0xff]
        %v1011 = vld [vmem:[%s5 + $0x58] sm:$0xff]
        %v1012 = vld [vmem:[%s5 + $0x60] sm:$0xff]
        %v1013 = vld [vmem:[%s5 + $0x68] sm:$0xff]
        %v1014 = vld [vmem:[%s5 + $0x70] sm:$0xff]
        %v1015 = vld [vmem:[%s5 + $0x78] sm:$0xff]
        %1016 = vmatprep.subr.mxu0 0.0
        %1017 = vmatpush1.msra.mxu0 %v1000
        %1018 = vmatprep.subr.mxu0 0.0
        %1019 = vmatpush1.msra.mxu0 %v1001
        %1020 = vmatprep.subr.mxu0 0.0
        %1021 = vmatpush1.msra.mxu0 %v1002
        %1022 = vmatprep.subr.mxu0 0.0
        %1023 = vmatpush1.msra.mxu0 %v1003
        %1024 = vmatprep.subr.mxu0 0.0
        %1025 = vmatpush1.msra.mxu0 %v1004
        %1026 = vmatprep.subr.mxu0 0.0
        %1027 = vmatpush1.msra.mxu0 %v1005
        %1028 = vmatprep.subr.mxu0 0.0
        %1029 = vmatpush1.msra.mxu0 %v1006
        %1030 = vmatprep.subr.mxu0 0.0
        %1031 = vmatpush1.msra.mxu0 %v1007
        %1032 = vmatprep.subr.mxu0 0.0
        %1033 = vmatpush1.msra.mxu0 %v1008
        %1034 = vmatprep.subr.mxu0 0.0
        %1035 = vmatpush1.msra.mxu0 %v1009
        %1036 = vmatprep.subr.mxu0 0.0
        %1037 = vmatpush1.msra.mxu0 %v1010
        %1038 = vmatprep.subr.mxu0 0.0
        %1039 = vmatpush1.msra.mxu0 %v1011
        %1040 = vmatprep.subr.mxu0 0.0
        %1041 = vmatpush1.msra.mxu0 %v1012
        %1042 = vmatprep.subr.mxu0 0.0
        %1043 = vmatpush1.msra.mxu0 %v1013
        %1044 = vmatprep.subr.mxu0 0.0
        %1045 = vmatpush1.msra.mxu0 %v1014
        %1046 = vmatprep.subr.mxu0 0.0
        %1047 = vmatpush1.msra.mxu0 %v1015
        %1048 = vmatprep.subr.mxu0 0.0
        %1049 = vmatpush1.msra.mxu0 0.0
        %1050 = vmatprep.subr.mxu0 0.0
        %1051 = vmatpush1.msra.mxu0 0.0
        %1052 = vmatprep.subr.mxu0 0.0
        %1053 = vmatpush1.msra.mxu0 0.0
        %1054 = vmatprep.subr.mxu0 0.0
        %1055 = vmatpush1.msra.mxu0 0.0
        %1056 = vmatprep.subr.mxu0 0.0
        %1057 = vmatpush1.msra.mxu0 0.0
        %1058 = vmatprep.subr.mxu0 0.0
        %1059 = vmatpush1.msra.mxu0 0.0
        %1060 = vmatprep.subr.mxu0 0.0
        %1061 = vmatpush1.msra.mxu0 0.0
        %1062 = vmatprep.subr.mxu0 0.0
        %1063 = vmatpush1.msra.mxu0 0.0
        %1064 = vmatprep.subr.mxu0 0.0
        %1065 = vmatpush1.msra.mxu0 0.0
        %1066 = vmatprep.subr.mxu0 0.0
        %1067 = vmatpush1.msra.mxu0 0.0
        %1068 = vmatprep.subr.mxu0 0.0
        %1069 = vmatpush1.msra.mxu0 0.0
        %1070 = vmatprep.subr.mxu0 0.0
        %1071 = vmatpush1.msra.mxu0 0.0
        %1072 = vmatprep.subr.mxu0 0.0
        %1073 = vmatpush1.msra.mxu0 0.0
        %1074 = vmatprep.subr.mxu0 0.0
        %1075 = vmatpush1.msra.mxu0 0.0
        %1076 = vmatprep.subr.mxu0 0.0
        %1077 = vmatpush1.msra.mxu0 0.0
        %1078 = vmatprep.subr.mxu0 0.0
        %1079 = vmatpush1.msra.mxu0 0.0
        %1080 = vmatprep.mubr.f32.mxu0 0.0
        %1081 = vmatmul.mubr.f32.gmra.mrb[0].mxu0 %v783
        %v1082 = vpop.f32.mrb[0].mxu0
        %v1083 = vadd.f32 0.0, %v1082
        %v1084 = vpop.f32.mrb[0].mxu0
        %1085 = vmatprep.mubr.f32.mxu0 0.0
        %1086 = vmatmul.mubr.f32.gmra.mrb[0].mxu0 %v784
        %v1087 = vpop.f32.mrb[0].mxu0
        %v1088 = vadd.f32 0.0, %v1087
        %v1089 = vpop.f32.mrb[0].mxu0
        %1090 = vmatprep.mubr.f32.mxu0 0.0
        %1091 = vmatmul.mubr.f32.gmra.mrb[0].mxu0 %v785
        %v1092 = vpop.f32.mrb[0].mxu0
        %v1093 = vadd.f32 0.0, %v1092
        %v1094 = vpop.f32.mrb[0].mxu0
        %1095 = vmatprep.mubr.f32.mxu0 0.0
        %1096 = vmatmul.mubr.f32.gmra.mrb[0].mxu0 %v786
        %v1097 = vpop.f32.mrb[0].mxu0
        %v1098 = vadd.f32 0.0, %v1097
        %v1099 = vpop.f32.mrb[0].mxu0
        %1100 = vmatprep.mubr.f32.mxu0 0.0
        %1101 = vmatmul.mubr.f32.gmra.mrb[0].mxu0 %v787
        %v1102 = vpop.f32.mrb[0].mxu0
        %v1103 = vadd.f32 0.0, %v1102
        %v1104 = vpop.f32.mrb[0].mxu0
        %1105 = vdwg.mxu0
        %1111 = vrot.lane.b32.xlu0 %v977, 14
        %v1112 = vpop.permute.xlu0 %1111
        %1113 = vrot.lane.b32.xlu0 %v982, 14
        %v1114 = vpop.permute.xlu0 %1113
        %1115 = vrot.lane.b32.xlu0 %v987, 14
        %v1116 = vpop.permute.xlu0 %1115
        %1117 = vrot.lane.b32.xlu0 %v992, 14
        %v1118 = vpop.permute.xlu0 %1117
        %1119 = vrot.lane.b32.xlu0 %v997, 14
        %v1120 = vpop.permute.xlu0 %1119
        %1131 = vrot.lane.b32.xlu0 %v1083, 29
        %v1132 = vpop.permute.xlu0 %1131
        %1133 = vrot.lane.b32.xlu0 %v1088, 29
        %v1134 = vpop.permute.xlu0 %1133
        %1135 = vrot.lane.b32.xlu0 %v1093, 29
        %v1136 = vpop.permute.xlu0 %1135
        %1137 = vrot.lane.b32.xlu0 %v1098, 29
        %v1138 = vpop.permute.xlu0 %1137
        %1139 = vrot.lane.b32.xlu0 %v1103, 29
        %v1140 = vpop.permute.xlu0 %1139
        %vm1146 = vcmask 113664
        %v1147 = vsel %vm1146, %v871, %v1112
        %v1148 = vsel %vm1146, %v876, %v1114
        %v1149 = vsel %vm1146, %v881, %v1116
        %v1150 = vsel %vm1146, %v886, %v1118
        %v1151 = vsel %vm1146, %v891, %v1120
        %vm1152 = vcmask 236544
        %v1153 = vsel %vm1152, %v1147, %v1132
        %v1154 = vsel %vm1152, %v1148, %v1134
        %v1155 = vsel %vm1152, %v1149, %v1136
        %v1156 = vsel %vm1152, %v1150, %v1138
        %v1157 = vsel %vm1152, %v1151, %v1140
        %v1158 = vld [vmem:[%s6] sm:$0xff]
        %v1159 = vld [vmem:[%s6 + $0x8] sm:$0xff]
        %v1160 = vld [vmem:[%s6 + $0x10] sm:$0x3]
        %v1161 = vld [vmem:[%s7] sm:$0xff]
        %v1162 = vld [vmem:[%s7 + $0x8] sm:$0xff]
        %v1163 = vld [vmem:[%s7 + $0x10] sm:$0x3]
        %1165 = vset.pattern.permute.xlu0 0
        %1166 = vperm.xlu0 %1165, %v1161
        %v1167 = vpop.permute.xlu0 %1166
        %1170 = vset.pattern.permute.xlu0 0
        %1171 = vperm.xlu0 %1170, %v1162
        %v1172 = vpop.permute.xlu0 %1171
        %1175 = vset.pattern.permute.xlu0 0
        %1176 = vperm.xlu0 %1175, %v1163
        %v1177 = vpop.permute.xlu0 %1176
        %vm1179 = vcmask 326656
        %v1181 = vsel %vm1179, %v1158, 0
        %v1184 = vsel %vm1179, %v1159, 0
        %v1187 = vsel %vm1179, %v1160, 0
        %1189 = vmatprep.subr.mxu0 0.0
        %1190 = vmatpush1.msra.mxu0 %v1153
        %1191 = vmatprep.subr.mxu0 0.0
        %1192 = vmatpush1.msra.mxu0 %v1154
        %1193 = vmatprep.subr.mxu0 0.0
        %1194 = vmatpush1.msra.mxu0 %v1155
        %1195 = vmatprep.subr.mxu0 0.0
        %1196 = vmatpush1.msra.mxu0 %v1156
        %1197 = vmatprep.subr.mxu0 0.0
        %1198 = vmatpush1.msra.mxu0 %v1157
        %1199 = vmatprep.subr.mxu0 0.0
        %1200 = vmatpush1.msra.mxu0 0.0
        %1201 = vmatprep.subr.mxu0 0.0
        %1202 = vmatpush1.msra.mxu0 0.0
        %1203 = vmatprep.subr.mxu0 0.0
        %1204 = vmatpush1.msra.mxu0 0.0
        %1205 = vmatprep.subr.mxu0 0.0
        %1206 = vmatpush1.msra.mxu0 0.0
        %1207 = vmatprep.subr.mxu0 0.0
        %1208 = vmatpush1.msra.mxu0 0.0
        %1209 = vmatprep.subr.mxu0 0.0
        %1210 = vmatpush1.msra.mxu0 0.0
        %1211 = vmatprep.subr.mxu0 0.0
        %1212 = vmatpush1.msra.mxu0 0.0
        %1213 = vmatprep.subr.mxu0 0.0
        %1214 = vmatpush1.msra.mxu0 0.0
        %1215 = vmatprep.subr.mxu0 0.0
        %1216 = vmatpush1.msra.mxu0 0.0
        %1217 = vmatprep.subr.mxu0 0.0
        %1218 = vmatpush1.msra.mxu0 0.0
        %1219 = vmatprep.subr.mxu0 0.0
        %1220 = vmatpush1.msra.mxu0 0.0
        %1221 = vmatprep.subr.mxu0 0.0
        %1222 = vmatpush1.msra.mxu0 0.0
        %1223 = vmatprep.subr.mxu0 0.0
        %1224 = vmatpush1.msra.mxu0 0.0
        %1225 = vmatprep.subr.mxu0 0.0
        %1226 = vmatpush1.msra.mxu0 0.0
        %1227 = vmatprep.subr.mxu0 0.0
        %1228 = vmatpush1.msra.mxu0 0.0
        %1229 = vmatprep.subr.mxu0 0.0
        %1230 = vmatpush1.msra.mxu0 0.0
        %1231 = vmatprep.subr.mxu0 0.0
        %1232 = vmatpush1.msra.mxu0 0.0
        %1233 = vmatprep.subr.mxu0 0.0
        %1234 = vmatpush1.msra.mxu0 0.0
        %1235 = vmatprep.subr.mxu0 0.0
        %1236 = vmatpush1.msra.mxu0 0.0
        %1237 = vmatprep.subr.mxu0 0.0
        %1238 = vmatpush1.msra.mxu0 0.0
        %1239 = vmatprep.subr.mxu0 0.0
        %1240 = vmatpush1.msra.mxu0 0.0
        %1241 = vmatprep.subr.mxu0 0.0
        %1242 = vmatpush1.msra.mxu0 0.0
        %1243 = vmatprep.subr.mxu0 0.0
        %1244 = vmatpush1.msra.mxu0 0.0
        %1245 = vmatprep.subr.mxu0 0.0
        %1246 = vmatpush1.msra.mxu0 0.0
        %1247 = vmatprep.subr.mxu0 0.0
        %1248 = vmatpush1.msra.mxu0 0.0
        %1249 = vmatprep.subr.mxu0 0.0
        %1250 = vmatpush1.msra.mxu0 0.0
        %1251 = vmatprep.subr.mxu0 0.0
        %1252 = vmatpush1.msra.mxu0 0.0
        %1253 = vmatprep.mubr.f32.mxu0 0.0
        %1254 = vmatmul.mubr.f32.gmra.mrb[0].mxu0 %v1181
        %v1255 = vpop.f32.mrb[0].mxu0
        %v1256 = vadd.f32 %v1167, %v1255
        %v1257 = vpop.f32.mrb[0].mxu0
        %1258 = vmatprep.mubr.f32.mxu0 0.0
        %1259 = vmatmul.mubr.f32.gmra.mrb[0].mxu0 %v1184
        %v1260 = vpop.f32.mrb[0].mxu0
        %v1261 = vadd.f32 %v1172, %v1260
        %v1262 = vpop.f32.mrb[0].mxu0
        %1263 = vmatprep.mubr.f32.mxu0 0.0
        %1264 = vmatmul.mubr.f32.gmra.mrb[0].mxu0 %v1187
        %v1265 = vpop.f32.mrb[0].mxu0
        %v1266 = vadd.f32 %v1177, %v1265
        %v1267 = vpop.f32.mrb[0].mxu0
        %1268 = vdwg.mxu0
        %vm1269 = vcmp.ge.f32.partialorder %v1256, 0.0
        %vm1270 = vcmp.ge.f32.partialorder %v1261, 0.0
        %vm1271 = vcmp.ge.f32.partialorder %v1266, 0.0
        %v1272 = vmul.f32 %v1256, 0.01
        %v1273 = vmul.f32 %v1261, 0.01
        %v1274 = vmul.f32 %v1266, 0.01
        %v1275 = vsel %vm1269, %v1256, %v1272
        %v1276 = vsel %vm1270, %v1261, %v1273
        %v1277 = vsel %vm1271, %v1266, %v1274
        %v1278 = vld [vmem:[%s8] sm:$0xff]
        %v1279 = vld [vmem:[%s8 + $0x8] sm:$0xff]
        %v1280 = vld [vmem:[%s8 + $0x10] sm:$0xff]
        %v1281 = vld [vmem:[%s8 + $0x18] sm:$0xff]
        %v1282 = vld [vmem:[%s8 + $0x20] sm:$0xff]
        %v1283 = vld [vmem:[%s8 + $0x28] sm:$0xf]
        %vm1284 = vcmask 359424
        %v1286 = vsel %vm1284, %v1275, 0
        %v1289 = vsel %vm1284, %v1276, 0
        %v1292 = vsel %vm1284, %v1277, 0
        %vm1294 = vcmask 1043456
        %v1296 = vsel %vm1294, %v1283, 0
        %1298 = vmatprep.subr.mxu0 0.0
        %1299 = vmatpush1.msra.mxu0 %v1278
        %1300 = vmatprep.subr.mxu0 0.0
        %1301 = vmatpush1.msra.mxu0 %v1279
        %1302 = vmatprep.subr.mxu0 0.0
        %1303 = vmatpush1.msra.mxu0 %v1280
        %1304 = vmatprep.subr.mxu0 0.0
        %1305 = vmatpush1.msra.mxu0 %v1281
        %1306 = vmatprep.subr.mxu0 0.0
        %1307 = vmatpush1.msra.mxu0 %v1282
        %1308 = vmatprep.subr.mxu0 0.0
        %1309 = vmatpush1.msra.mxu0 %v1296
        %1310 = vmatprep.subr.mxu0 0.0
        %1311 = vmatpush1.msra.mxu0 0.0
        %1312 = vmatprep.subr.mxu0 0.0
        %1313 = vmatpush1.msra.mxu0 0.0
        %1314 = vmatprep.subr.mxu0 0.0
        %1315 = vmatpush1.msra.mxu0 0.0
        %1316 = vmatprep.subr.mxu0 0.0
        %1317 = vmatpush1.msra.mxu0 0.0
        %1318 = vmatprep.subr.mxu0 0.0
        %1319 = vmatpush1.msra.mxu0 0.0
        %1320 = vmatprep.subr.mxu0 0.0
        %1321 = vmatpush1.msra.mxu0 0.0
        %1322 = vmatprep.subr.mxu0 0.0
        %1323 = vmatpush1.msra.mxu0 0.0
        %1324 = vmatprep.subr.mxu0 0.0
        %1325 = vmatpush1.msra.mxu0 0.0
        %1326 = vmatprep.subr.mxu0 0.0
        %1327 = vmatpush1.msra.mxu0 0.0
        %1328 = vmatprep.subr.mxu0 0.0
        %1329 = vmatpush1.msra.mxu0 0.0
        %1330 = vmatprep.subr.mxu0 0.0
        %1331 = vmatpush1.msra.mxu0 0.0
        %1332 = vmatprep.subr.mxu0 0.0
        %1333 = vmatpush1.msra.mxu0 0.0
        %1334 = vmatprep.subr.mxu0 0.0
        %1335 = vmatpush1.msra.mxu0 0.0
        %1336 = vmatprep.subr.mxu0 0.0
        %1337 = vmatpush1.msra.mxu0 0.0
        %1338 = vmatprep.subr.mxu0 0.0
        %1339 = vmatpush1.msra.mxu0 0.0
        %1340 = vmatprep.subr.mxu0 0.0
        %1341 = vmatpush1.msra.mxu0 0.0
        %1342 = vmatprep.subr.mxu0 0.0
        %1343 = vmatpush1.msra.mxu0 0.0
        %1344 = vmatprep.subr.mxu0 0.0
        %1345 = vmatpush1.msra.mxu0 0.0
        %1346 = vmatprep.subr.mxu0 0.0
        %1347 = vmatpush1.msra.mxu0 0.0
        %1348 = vmatprep.subr.mxu0 0.0
        %1349 = vmatpush1.msra.mxu0 0.0
        %1350 = vmatprep.subr.mxu0 0.0
        %1351 = vmatpush1.msra.mxu0 0.0
        %1352 = vmatprep.subr.mxu0 0.0
        %1353 = vmatpush1.msra.mxu0 0.0
        %1354 = vmatprep.subr.mxu0 0.0
        %1355 = vmatpush1.msra.mxu0 0.0
        %1356 = vmatprep.subr.mxu0 0.0
        %1357 = vmatpush1.msra.mxu0 0.0
        %1358 = vmatprep.subr.mxu0 0.0
        %1359 = vmatpush1.msra.mxu0 0.0
        %1360 = vmatprep.subr.mxu0 0.0
        %1361 = vmatpush1.msra.mxu0 0.0
        %1362 = vmatprep.mubr.f32.mxu0 0.0
        %1363 = vmatmul.mubr.f32.gmra.mrb[0].mxu0 %v1286
        %v1364 = vpop.f32.mrb[0].mxu0
        %v1365 = vadd.f32 0.0, %v1364
        %v1366 = vpop.f32.mrb[0].mxu0
        %1367 = vmatprep.mubr.f32.mxu0 0.0
        %1368 = vmatmul.mubr.f32.gmra.mrb[0].mxu0 %v1289
        %v1369 = vpop.f32.mrb[0].mxu0
        %v1370 = vadd.f32 0.0, %v1369
        %v1371 = vpop.f32.mrb[0].mxu0
        %1372 = vmatprep.mubr.f32.mxu0 0.0
        %1373 = vmatmul.mubr.f32.gmra.mrb[0].mxu0 %v1292
        %v1374 = vpop.f32.mrb[0].mxu0
        %v1375 = vadd.f32 0.0, %v1374
        %v1376 = vpop.f32.mrb[0].mxu0
        %1377 = vdwg.mxu0
        %v1379 = vrot.slane %v1365, 1
        %1380 = vrot.lane.b32.xlu0 %v1379, 22
        %v1381 = vpop.permute.xlu0 %1380
        %v1383 = vrot.slane %v1365, 2
        %1384 = vrot.lane.b32.xlu0 %v1383, 44
        %v1385 = vpop.permute.xlu0 %1384
        %v1387 = vrot.slane %v1365, 3
        %1388 = vrot.lane.b32.xlu0 %v1387, 66
        %v1389 = vpop.permute.xlu0 %1388
        %v1391 = vrot.slane %v1365, 4
        %1392 = vrot.lane.b32.xlu0 %v1391, 88
        %v1393 = vpop.permute.xlu0 %1392
        %v1395 = vrot.slane %v1365, 5
        %1396 = vrot.lane.b32.xlu0 %v1395, 110
        %v1397 = vpop.permute.xlu0 %1396
        %v1399 = vrot.slane %v1365, 6
        %1400 = vrot.lane.b32.xlu0 %v1399, 4
        %v1401 = vpop.permute.xlu0 %1400
        %v1403 = vrot.slane %v1365, 7
        %1404 = vrot.lane.b32.xlu0 %v1403, 26
        %v1405 = vpop.permute.xlu0 %1404
        %1408 = vrot.lane.b32.xlu0 %v1370, 48
        %v1409 = vpop.permute.xlu0 %1408
        %v1411 = vrot.slane %v1370, 1
        %1412 = vrot.lane.b32.xlu0 %v1411, 70
        %v1413 = vpop.permute.xlu0 %1412
        %v1415 = vrot.slane %v1370, 2
        %1416 = vrot.lane.b32.xlu0 %v1415, 92
        %v1417 = vpop.permute.xlu0 %1416
        %v1419 = vrot.slane %v1370, 3
        %1420 = vrot.lane.b32.xlu0 %v1419, 114
        %v1421 = vpop.permute.xlu0 %1420
        %v1423 = vrot.slane %v1370, 4
        %1424 = vrot.lane.b32.xlu0 %v1423, 8
        %v1425 = vpop.permute.xlu0 %1424
        %v1427 = vrot.slane %v1370, 5
        %1428 = vrot.lane.b32.xlu0 %v1427, 30
        %v1429 = vpop.permute.xlu0 %1428
        %v1431 = vrot.slane %v1370, 6
        %1432 = vrot.lane.b32.xlu0 %v1431, 52
        %v1433 = vpop.permute.xlu0 %1432
        %v1435 = vrot.slane %v1370, 7
        %1436 = vrot.lane.b32.xlu0 %v1435, 74
        %v1437 = vpop.permute.xlu0 %1436
        %vm1439 = vcmask 179200
        %v1440 = vsel %vm1439, %v1365, %v1381
        %v1441 = vsel %vm1284, %v1440, %v1385
        %vm1442 = vcmask 539648
        %v1443 = vsel %vm1442, %v1441, %v1389
        %vm1444 = vcmask 719872
        %v1445 = vsel %vm1444, %v1443, %v1393
        %vm1446 = vcmask 900096
        %v1447 = vsel %vm1446, %v1445, %v1397
        %vm1448 = vcmask 31744
        %v1449 = vsel %vm1448, %v1397, %v1401
        %vm1450 = vcmask 211968
        %v1451 = vsel %vm1450, %v1449, %v1405
        %vm1452 = vcmask 392192
        %v1453 = vsel %vm1452, %v1451, %v1409
        %vm1454 = vcmask 572416
        %v1455 = vsel %vm1454, %v1453, %v1413
        %vm1456 = vcmask 752640
        %v1457 = vsel %vm1456, %v1455, %v1417
        %vm1458 = vcmask 932864
        %v1459 = vsel %vm1458, %v1457, %v1421
        %vm1460 = vcmask 64512
        %v1461 = vsel %vm1460, %v1421, %v1425
        %vm1462 = vcmask 244736
        %v1463 = vsel %vm1462, %v1461, %v1429
        %vm1464 = vcmask 424960
        %v1465 = vsel %vm1464, %v1463, %v1433
        %vm1466 = vcmask 605184
        %v1467 = vsel %vm1466, %v1465, %v1437
        %v1469 = vrot.slane %v1375, 1
        %1470 = vrot.lane.b32.xlu0 %v1469, 22
        %v1471 = vpop.permute.xlu0 %1470
        %v1473 = vsel %vm1439, %v1375, %v1471
        %1475 = vrot.lane.b32.xlu0 %v1473, 96
        %v1476 = vpop.permute.xlu0 %1475
        %vm1478 = vcmask 785408
        %v1479 = vsel %vm1478, %v1467, %v1476
        %v1480 = vld [vmem:[%s9] sm:$0xff]
        %v1481 = vld [vmem:[%s9 + $0x8] sm:$0xff]
        %v1482 = vld [vmem:[%s9 + $0x10] sm:$0xff]
        %v1483 = vld [vmem:[%s9 + $0x18] sm:$0xff]
        %v1484 = vld [vmem:[%s9 + $0x20] sm:$0xff]
        %v1485 = vld [vmem:[%s9 + $0x28] sm:$0xff]
        %v1486 = vld [vmem:[%s9 + $0x30] sm:$0xff]
        %v1487 = vld [vmem:[%s9 + $0x38] sm:$0xff]
        %v1488 = vld [vmem:[%s9 + $0x40] sm:$0xff]
        %v1489 = vld [vmem:[%s9 + $0x48] sm:$0xff]
        %v1490 = vld [vmem:[%s9 + $0x50] sm:$0xff]
        %v1491 = vld [vmem:[%s9 + $0x58] sm:$0xff]
        %v1492 = vld [vmem:[%s9 + $0x60] sm:$0xff]
        %v1493 = vld [vmem:[%s9 + $0x68] sm:$0xff]
        %v1494 = vld [vmem:[%s9 + $0x70] sm:$0xff]
        %v1495 = vld [vmem:[%s9 + $0x78] sm:$0xff]
        %v1496 = vld [vmem:[%s9 + $0x80] sm:$0xff]
        %v1497 = vld [vmem:[%s9 + $0x88] sm:$0xff]
        %v1498 = vld [vmem:[%s9 + $0x90] sm:$0xff]
        %v1499 = vld [vmem:[%s9 + $0x98] sm:$0xff]
        %v1500 = vld [vmem:[%s9 + $0xa0] sm:$0xff]
        %v1501 = vld [vmem:[%s9 + $0xa8] sm:$0xff]
        %v1502 = vld [vmem:[%s9 + $0xb0] sm:$0xff]
        %v1503 = vld [vmem:[%s9 + $0xb8] sm:$0xff]
        %v1504 = vld [vmem:[%s9 + $0xc0] sm:$0xff]
        %v1505 = vld [vmem:[%s9 + $0xc8] sm:$0xff]
        %v1506 = vld [vmem:[%s9 + $0xd0] sm:$0xff]
        %v1507 = vld [vmem:[%s9 + $0xd8] sm:$0xff]
        %v1508 = vld [vmem:[%s9 + $0xe0] sm:$0xff]
        %v1509 = vld [vmem:[%s9 + $0xe8] sm:$0xff]
        %v1510 = vld [vmem:[%s9 + $0xf0] sm:$0xff]
        %v1511 = vld [vmem:[%s9 + $0xf8] sm:$0xff]
        %v1512 = vld [vmem:[%s9 + $0x100] sm:$0xff]
        %v1513 = vld [vmem:[%s9 + $0x108] sm:$0xff]
        %v1514 = vld [vmem:[%s9 + $0x110] sm:$0xff]
        %v1515 = vld [vmem:[%s9 + $0x118] sm:$0xff]
        %v1516 = vld [vmem:[%s9 + $0x120] sm:$0xff]
        %v1517 = vld [vmem:[%s9 + $0x128] sm:$0xff]
        %v1518 = vld [vmem:[%s9 + $0x130] sm:$0xff]
        %v1519 = vld [vmem:[%s9 + $0x138] sm:$0xff]
        %v1520 = vld [vmem:[%s9 + $0x140] sm:$0xff]
        %v1521 = vld [vmem:[%s9 + $0x148] sm:$0xff]
        %v1522 = vld [vmem:[%s9 + $0x150] sm:$0xff]
        %v1523 = vld [vmem:[%s9 + $0x158] sm:$0xff]
        %v1524 = vld [vmem:[%s9 + $0x160] sm:$0xff]
        %v1525 = vld [vmem:[%s9 + $0x168] sm:$0xff]
        %v1526 = vld [vmem:[%s9 + $0x170] sm:$0xff]
        %v1527 = vld [vmem:[%s9 + $0x178] sm:$0xff]
        %v1528 = vld [vmem:[%s9 + $0x180] sm:$0xff]
        %v1529 = vld [vmem:[%s9 + $0x188] sm:$0xf]
        %v1530 = vld [vmem:[%s10] sm:$0x1]
        %vm1531 = vcmask 97280
        %v1532 = vsel %vm1531, %v1476, 0
        %v1535 = vsel %vm1294, %v1529, 0
        %1537 = vmatprep.subr.mxu0 0.0
        %1538 = vmatpush1.msra.mxu0 %v1480
        %1539 = vmatprep.subr.mxu0 0.0
        %1540 = vmatpush1.msra.mxu0 %v1481
        %1541 = vmatprep.subr.mxu0 0.0
        %1542 = vmatpush1.msra.mxu0 %v1482
        %1543 = vmatprep.subr.mxu0 0.0
        %1544 = vmatpush1.msra.mxu0 %v1483
        %1545 = vmatprep.subr.mxu0 0.0
        %1546 = vmatpush1.msra.mxu0 %v1484
        %1547 = vmatprep.subr.mxu0 0.0
        %1548 = vmatpush1.msra.mxu0 %v1485
        %1549 = vmatprep.subr.mxu0 0.0
        %1550 = vmatpush1.msra.mxu0 %v1486
        %1551 = vmatprep.subr.mxu0 0.0
        %1552 = vmatpush1.msra.mxu0 %v1487
        %1553 = vmatprep.subr.mxu0 0.0
        %1554 = vmatpush1.msra.mxu0 %v1488
        %1555 = vmatprep.subr.mxu0 0.0
        %1556 = vmatpush1.msra.mxu0 %v1489
        %1557 = vmatprep.subr.mxu0 0.0
        %1558 = vmatpush1.msra.mxu0 %v1490
        %1559 = vmatprep.subr.mxu0 0.0
        %1560 = vmatpush1.msra.mxu0 %v1491
        %1561 = vmatprep.subr.mxu0 0.0
        %1562 = vmatpush1.msra.mxu0 %v1492
        %1563 = vmatprep.subr.mxu0 0.0
        %1564 = vmatpush1.msra.mxu0 %v1493
        %1565 = vmatprep.subr.mxu0 0.0
        %1566 = vmatpush1.msra.mxu0 %v1494
        %1567 = vmatprep.subr.mxu0 0.0
        %1568 = vmatpush1.msra.mxu0 %v1495
        %1569 = vmatprep.subr.mxu0 0.0
        %1570 = vmatpush1.msra.mxu0 %v1496
        %1571 = vmatprep.subr.mxu0 0.0
        %1572 = vmatpush1.msra.mxu0 %v1497
        %1573 = vmatprep.subr.mxu0 0.0
        %1574 = vmatpush1.msra.mxu0 %v1498
        %1575 = vmatprep.subr.mxu0 0.0
        %1576 = vmatpush1.msra.mxu0 %v1499
        %1577 = vmatprep.subr.mxu0 0.0
        %1578 = vmatpush1.msra.mxu0 %v1500
        %1579 = vmatprep.subr.mxu0 0.0
        %1580 = vmatpush1.msra.mxu0 %v1501
        %1581 = vmatprep.subr.mxu0 0.0
        %1582 = vmatpush1.msra.mxu0 %v1502
        %1583 = vmatprep.subr.mxu0 0.0
        %1584 = vmatpush1.msra.mxu0 %v1503
        %1585 = vmatprep.subr.mxu0 0.0
        %1586 = vmatpush1.msra.mxu0 %v1504
        %1587 = vmatprep.subr.mxu0 0.0
        %1588 = vmatpush1.msra.mxu0 %v1505
        %1589 = vmatprep.subr.mxu0 0.0
        %1590 = vmatpush1.msra.mxu0 %v1506
        %1591 = vmatprep.subr.mxu0 0.0
        %1592 = vmatpush1.msra.mxu0 %v1507
        %1593 = vmatprep.subr.mxu0 0.0
        %1594 = vmatpush1.msra.mxu0 %v1508
        %1595 = vmatprep.subr.mxu0 0.0
        %1596 = vmatpush1.msra.mxu0 %v1509
        %1597 = vmatprep.subr.mxu0 0.0
        %1598 = vmatpush1.msra.mxu0 %v1510
        %1599 = vmatprep.subr.mxu0 0.0
        %1600 = vmatpush1.msra.mxu0 %v1511
        %1601 = vmatprep.mubr.f32.mxu0 %v1459
        %1602 = vmatmul.mubr.f32.gmra.mrb[0].mxu0 %v1447
        %v1603 = vpop.f32.mrb[0].mxu0
        %v1604 = vadd.f32 %v1530, %v1603
        %v1605 = vpop.f32.mrb[0].mxu0
        %1606 = vdwg.mxu0
        %1607 = vmatprep.subr.mxu0 0.0
        %1608 = vmatpush1.msra.mxu0 %v1512
        %1609 = vmatprep.subr.mxu0 0.0
        %1610 = vmatpush1.msra.mxu0 %v1513
        %1611 = vmatprep.subr.mxu0 0.0
        %1612 = vmatpush1.msra.mxu0 %v1514
        %1613 = vmatprep.subr.mxu0 0.0
        %1614 = vmatpush1.msra.mxu0 %v1515
        %1615 = vmatprep.subr.mxu0 0.0
        %1616 = vmatpush1.msra.mxu0 %v1516
        %1617 = vmatprep.subr.mxu0 0.0
        %1618 = vmatpush1.msra.mxu0 %v1517
        %1619 = vmatprep.subr.mxu0 0.0
        %1620 = vmatpush1.msra.mxu0 %v1518
        %1621 = vmatprep.subr.mxu0 0.0
        %1622 = vmatpush1.msra.mxu0 %v1519
        %1623 = vmatprep.subr.mxu0 0.0
        %1624 = vmatpush1.msra.mxu0 %v1520
        %1625 = vmatprep.subr.mxu0 0.0
        %1626 = vmatpush1.msra.mxu0 %v1521
        %1627 = vmatprep.subr.mxu0 0.0
        %1628 = vmatpush1.msra.mxu0 %v1522
        %1629 = vmatprep.subr.mxu0 0.0
        %1630 = vmatpush1.msra.mxu0 %v1523
        %1631 = vmatprep.subr.mxu0 0.0
        %1632 = vmatpush1.msra.mxu0 %v1524
        %1633 = vmatprep.subr.mxu0 0.0
        %1634 = vmatpush1.msra.mxu0 %v1525
        %1635 = vmatprep.subr.mxu0 0.0
        %1636 = vmatpush1.msra.mxu0 %v1526
        %1637 = vmatprep.subr.mxu0 0.0
        %1638 = vmatpush1.msra.mxu0 %v1527
        %1639 = vmatprep.subr.mxu0 0.0
        %1640 = vmatpush1.msra.mxu0 %v1528
        %1641 = vmatprep.subr.mxu0 0.0
        %1642 = vmatpush1.msra.mxu0 %v1535
        %1643 = vmatprep.subr.mxu0 0.0
        %1644 = vmatpush1.msra.mxu0 0.0
        %1645 = vmatprep.subr.mxu0 0.0
        %1646 = vmatpush1.msra.mxu0 0.0
        %1647 = vmatprep.subr.mxu0 0.0
        %1648 = vmatpush1.msra.mxu0 0.0
        %1649 = vmatprep.subr.mxu0 0.0
        %1650 = vmatpush1.msra.mxu0 0.0
        %1651 = vmatprep.subr.mxu0 0.0
        %1652 = vmatpush1.msra.mxu0 0.0
        %1653 = vmatprep.subr.mxu0 0.0
        %1654 = vmatpush1.msra.mxu0 0.0
        %1655 = vmatprep.subr.mxu0 0.0
        %1656 = vmatpush1.msra.mxu0 0.0
        %1657 = vmatprep.subr.mxu0 0.0
        %1658 = vmatpush1.msra.mxu0 0.0
        %1659 = vmatprep.subr.mxu0 0.0
        %1660 = vmatpush1.msra.mxu0 0.0
        %1661 = vmatprep.subr.mxu0 0.0
        %1662 = vmatpush1.msra.mxu0 0.0
        %1663 = vmatprep.subr.mxu0 0.0
        %1664 = vmatpush1.msra.mxu0 0.0
        %1665 = vmatprep.subr.mxu0 0.0
        %1666 = vmatpush1.msra.mxu0 0.0
        %1667 = vmatprep.subr.mxu0 0.0
        %1668 = vmatpush1.msra.mxu0 0.0
        %1669 = vmatprep.subr.mxu0 0.0
        %1670 = vmatpush1.msra.mxu0 0.0
        %1671 = vmatprep.mubr.f32.mxu0 %v1532
        %1672 = vmatmul.mubr.f32.gmra.mrb[0].mxu0 %v1479
        %v1673 = vpop.f32.mrb[0].mxu0
        %v1674 = vadd.f32 %v1604, %v1673
        %v1675 = vpop.f32.mrb[0].mxu0
        %1676 = vdwg.mxu0
        %vm1677 = vcmp.ge.f32.partialorder %v1674, 0.0
        %v1678 = vmul.f32 %v1674, 0.01
        %v1679 = vsel %vm1677, %v1674, %v1678
        %v1680 = vld [vmem:[%s11] sm:$0xff]
        %v1681 = vld [vmem:[%s11 + $0x8] sm:$0xff]
        %v1682 = vld [vmem:[%s11 + $0x10] sm:$0xff]
        %v1683 = vld [vmem:[%s11 + $0x18] sm:$0xff]
        %v1684 = vld [vmem:[%s12] sm:$0x1]
        %vm1685 = vcmask 261120
        %v1687 = vsel %vm1685, %v1679, 0
        %1689 = vmatprep.subr.mxu0 0.0
        %1690 = vmatpush1.msra.mxu0 %v1680
        %1691 = vmatprep.subr.mxu0 0.0
        %1692 = vmatpush1.msra.mxu0 %v1681
        %1693 = vmatprep.subr.mxu0 0.0
        %1694 = vmatpush1.msra.mxu0 %v1682
        %1695 = vmatprep.subr.mxu0 0.0
        %1696 = vmatpush1.msra.mxu0 %v1683
        %1697 = vmatprep.subr.mxu0 0.0
        %1698 = vmatpush1.msra.mxu0 0.0
        %1699 = vmatprep.subr.mxu0 0.0
        %1700 = vmatpush1.msra.mxu0 0.0
        %1701 = vmatprep.subr.mxu0 0.0
        %1702 = vmatpush1.msra.mxu0 0.0
        %1703 = vmatprep.subr.mxu0 0.0
        %1704 = vmatpush1.msra.mxu0 0.0
        %1705 = vmatprep.subr.mxu0 0.0
        %1706 = vmatpush1.msra.mxu0 0.0
        %1707 = vmatprep.subr.mxu0 0.0
        %1708 = vmatpush1.msra.mxu0 0.0
        %1709 = vmatprep.subr.mxu0 0.0
        %1710 = vmatpush1.msra.mxu0 0.0
        %1711 = vmatprep.subr.mxu0 0.0
        %1712 = vmatpush1.msra.mxu0 0.0
        %1713 = vmatprep.subr.mxu0 0.0
        %1714 = vmatpush1.msra.mxu0 0.0
        %1715 = vmatprep.subr.mxu0 0.0
        %1716 = vmatpush1.msra.mxu0 0.0
        %1717 = vmatprep.subr.mxu0 0.0
        %1718 = vmatpush1.msra.mxu0 0.0
        %1719 = vmatprep.subr.mxu0 0.0
        %1720 = vmatpush1.msra.mxu0 0.0
        %1721 = vmatprep.subr.mxu0 0.0
        %1722 = vmatpush1.msra.mxu0 0.0
        %1723 = vmatprep.subr.mxu0 0.0
        %1724 = vmatpush1.msra.mxu0 0.0
        %1725 = vmatprep.subr.mxu0 0.0
        %1726 = vmatpush1.msra.mxu0 0.0
        %1727 = vmatprep.subr.mxu0 0.0
        %1728 = vmatpush1.msra.mxu0 0.0
        %1729 = vmatprep.subr.mxu0 0.0
        %1730 = vmatpush1.msra.mxu0 0.0
        %1731 = vmatprep.subr.mxu0 0.0
        %1732 = vmatpush1.msra.mxu0 0.0
        %1733 = vmatprep.subr.mxu0 0.0
        %1734 = vmatpush1.msra.mxu0 0.0
        %1735 = vmatprep.subr.mxu0 0.0
        %1736 = vmatpush1.msra.mxu0 0.0
        %1737 = vmatprep.subr.mxu0 0.0
        %1738 = vmatpush1.msra.mxu0 0.0
        %1739 = vmatprep.subr.mxu0 0.0
        %1740 = vmatpush1.msra.mxu0 0.0
        %1741 = vmatprep.subr.mxu0 0.0
        %1742 = vmatpush1.msra.mxu0 0.0
        %1743 = vmatprep.subr.mxu0 0.0
        %1744 = vmatpush1.msra.mxu0 0.0
        %1745 = vmatprep.subr.mxu0 0.0
        %1746 = vmatpush1.msra.mxu0 0.0
        %1747 = vmatprep.subr.mxu0 0.0
        %1748 = vmatpush1.msra.mxu0 0.0
        %1749 = vmatprep.subr.mxu0 0.0
        %1750 = vmatpush1.msra.mxu0 0.0
        %1751 = vmatprep.subr.mxu0 0.0
        %1752 = vmatpush1.msra.mxu0 0.0
        %1753 = vmatprep.mubr.f32.mxu0 0.0
        %1754 = vmatmul.mubr.f32.gmra.mrb[0].mxu0 %v1687
        %v1755 = vpop.f32.mrb[0].mxu0
        %v1756 = vadd.f32 %v1684, %v1755
        %v1757 = vpop.f32.mrb[0].mxu0
        %1758 = vdwg.mxu0
        %vm1759 = vcmask 16384
        %1760 = vst.msk [vmem:[%s432] sm:$0x1] %vm1759, %v1756
        %s1761 = sand.u32 %s313, 1
        %s1762 = scalar_lea.sflag [#allocation3], %s1761
        %s1763 = sand.u32 %s313, 1
        %s1764 = scalar_lea.vmem [#allocation2], %s1763
        // Predicated region
        $region73: #{tsception_forward.1} parent=71 // pred_check
          %p1765 = pneg %p323
        $region74: #{tsception_forward.1} parent=71 // pred_check_branch
          %1767 = sbr.rel (%p1765) target = $region76
        $region75: #{tsception_forward.1} parent=71 // pred_region
          %s1769 = ssub.s32 16, 16
          %1770 = vsyncadd %s1762, %s1769
          %s1771 = smul.addr %s27, 16
          %s1772 = scalar_lea.hbm %s13, %s1771
          %s1774 = sshll.u32 %s1764, 4
          %s1775 = int_to_ptr.vmem [resolvable:$true] %s1774
          %1777 = dma.vmem_to_hbm [thread:$0]  %s1775, 16, %s1772, %s1762
        $region76: #{tsception_forward.1} parent=71 // pred_fallthru
          _
      $region72: #{tsception_forward.1} parent=5 // pred_fallthru
        _
      %p1778 = scmp.le.s32.totalorder 2, %s22
      // Predicated region
      $region77: #{tsception_forward.1} parent=5 // pred_check
        %p1779 = pneg %p1778
      $region78: #{tsception_forward.1} parent=5 // pred_check_branch
        %1781 = sbr.rel (%p1779) target = $region80
      $region79: #{tsception_forward.1} parent=5 // pred_region
        %s1782 = ssub.s32 %s22, 2
        // Predicated region
        $region81: #{tsception_forward.1} parent=79 // pred_check
          %p1783 = pneg %p329
        $region82: #{tsception_forward.1} parent=79 // pred_check_branch
          %1785 = sbr.rel (%p1783) target = $region84
        $region83: #{tsception_forward.1} parent=79 // pred_region
          %s1786 = sand.u32 %s314, 1
          %s1787 = scalar_lea.sflag [#allocation3], %s1786
          %s1788 = sand.u32 %s314, 1
          %s1789 = scalar_lea.vmem [#allocation2], %s1788
          %1790 = dma.done %s1787, 16
        $region84: #{tsception_forward.1} parent=79 // pred_fallthru
          _
      $region80: #{tsception_forward.1} parent=5 // pred_fallthru
        _
    $region6: #{tsception_forward.1} parent=1 // loop_footer
      %s26 = sadd.s32 1, %s22
    $region7: #{tsception_forward.1} parent=1 // loop_footer_branch
      %21 = sbr.rel target = $region3
    $region8: #{tsception_forward.1} parent=1 // loop_exit
      _
    %1791 = vsyncpa [#allocation3], 1
    %s1792 = scalar_lea.sflag [#allocation3], 1
    %1793 = vsyncpa %s1792, 1

</llo_original>
